<compile_context>
chip_gen: v5e
topology: v5e:2x2
jax: 0.10.0
libtpu: 0.0.40
codegen_flags: <defaults>
</compile_context>

<pallas_src>
import functools

import jax
import jax.numpy as jnp
from jax import lax
from jax.experimental import pallas as pl
from jax.experimental.pallas import tpu as pltpu


# ---------------------------------------------------------------------------
# Recurrent LSTM kernel: one grid step == TB timesteps of one batch block.
# ---------------------------------------------------------------------------
def _lstm_kernel(gin_ref, whh_ref, h_ref, h_sc, c_sc, *, tb):
    """
    gin_ref: (TB, 4, BB, H)  precomputed x@W_ih^T + b, gate-major (i, f, g, o)
    whh_ref: (4, H, H)       per-gate hidden weights, already transposed
    h_ref  : (TB, BB, H)     output hidden-state sequence for this chunk
    h_sc   : (BB, H)         VMEM carry (hidden), persists across time steps
    c_sc   : (BB, H)         VMEM carry (cell),   persists across time steps
    """
    t = pl.program_id(1)  # time-chunk index (axis 0 is the batch-block index)

    @pl.when(t == 0)
    def _():
        h_sc[...] = jnp.zeros_like(h_sc)
        c_sc[...] = jnp.zeros_like(c_sc)

    # Per-gate hidden weights, loaded once per grid step (hoisted out of loop).
    w_i = whh_ref[0]
    w_f = whh_ref[1]
    w_g = whh_ref[2]
    w_o = whh_ref[3]

    # Static unroll over the TB timesteps in this chunk (TB is small), so all
    # ref indices are static and the LLO scheduler sees the whole chunk.
    for s in range(tb):
        h_prev = h_sc[...]
        c_prev = c_sc[...]
        g_in = gin_ref[s]  # (4, BB, H)

        i_g = jax.nn.sigmoid(
            jnp.dot(h_prev, w_i, preferred_element_type=jnp.float32) + g_in[0])
        f_g = jax.nn.sigmoid(
            jnp.dot(h_prev, w_f, preferred_element_type=jnp.float32) + g_in[1])
        g_g = jnp.tanh(
            jnp.dot(h_prev, w_g, preferred_element_type=jnp.float32) + g_in[2])
        o_g = jax.nn.sigmoid(
            jnp.dot(h_prev, w_o, preferred_element_type=jnp.float32) + g_in[3])

        c_new = f_g * c_prev + i_g * g_g
        h_new = o_g * jnp.tanh(c_new)

        c_sc[...] = c_new
        h_sc[...] = h_new
        h_ref[s] = h_new


# ---------------------------------------------------------------------------
# Output projection kernel: y = sigmoid(h @ W_out^T + b_out), lane-dense rows.
# ---------------------------------------------------------------------------
def _proj_kernel(h_ref, wout_ref, bout_ref, y_ref):
    y_ref[...] = jax.nn.sigmoid(
        jnp.dot(h_ref[...], wout_ref[...], preferred_element_type=jnp.float32)
        + bout_ref[...]
    )


def dkt_forward(q, r, params, *, time_block=16, row_block=256):
    """q, r: int32 [B, T].  Returns float32 [B, T, num_q]."""
    emb_table = params["emb"]            # (2*num_q, E)
    w_ih = params["w_ih"]                # (4H, E)  gate order i, f, g, o
    w_hh = params["w_hh"]                # (4H, H)
    b_ih = params["b_ih"]                # (4H,)
    b_hh = params["b_hh"]                # (4H,)
    w_out = params["w_out"]              # (Q, H)
    b_out = params["b_out"]              # (Q,)

    B, T = q.shape
    E = emb_table.shape[1]
    H = w_hh.shape[1]
    Q = w_out.shape[0]

    # ---- Glue (XLA): embedding gather in time-major order, hoisted input
    #      projection with bias folded in, gate-major layout (T, 4, B, H). ----
    x_idx_tm = (q + r).T                                       # (T, B)
    x_tm = jnp.take(emb_table, x_idx_tm, axis=0).astype(jnp.float32)  # (T, B, E)

    w_ih_g = w_ih.reshape(4, H, E).astype(jnp.float32)         # (4, H, E)
    b_g = (b_ih + b_hh).reshape(4, H).astype(jnp.float32)      # (4, H)
    gates_in = (jnp.einsum("tbe,ghe->tgbh", x_tm, w_ih_g)
                + b_g[None, :, None, :])                       # (T, 4, B, H)

    # Per-gate hidden weights, transposed so the kernel computes h @ W_g.
    whh_g = jnp.transpose(w_hh.reshape(4, H, H), (0, 2, 1)).astype(jnp.float32)

    # ---- Time chunking (pad T at the end; padded steps are discarded). ----
    TB = min(time_block, T)
    T_pad = pl.cdiv(T, TB) * TB
    if T_pad != T:
        gates_in = jnp.pad(
            gates_in, ((0, T_pad - T), (0, 0), (0, 0), (0, 0)))

    # ---- Batch blocking: outer "parallel" grid axis (megacore on v7x). ----
    BB = B
    for cand in (128, 64, 32, 16, 8):
        if B >= 2 * cand and B % cand == 0:
            BB = cand
            break

    lstm_kernel = functools.partial(_lstm_kernel, tb=TB)

    h_seq = pl.pallas_call(
        lstm_kernel,
        out_shape=jax.ShapeDtypeStruct((T_pad, B, H), jnp.float32),
        grid_spec=pltpu.PrefetchScalarGridSpec(
            num_scalar_prefetch=0,
            grid=(B // BB, T_pad // TB),
            in_specs=[
                pl.BlockSpec((TB, 4, BB, H), lambda b, t: (t, 0, b, 0)),
                pl.BlockSpec((4, H, H), lambda b, t: (0, 0, 0)),
            ],
            out_specs=pl.BlockSpec((TB, BB, H), lambda b, t: (t, b, 0)),
            scratch_shapes=[
                pltpu.VMEM((BB, H), jnp.float32),   # h carry
                pltpu.VMEM((BB, H), jnp.float32),   # c carry
            ],
        ),
        compiler_params=pltpu.CompilerParams(
            # Batch blocks are independent; the time recurrence is sequential.
            dimension_semantics=("parallel", "arbitrary"),
        ),
    )(gates_in, whh_g)

    h_seq = h_seq[:T]                                          # (T, B, H)

    # ---- Output projection + sigmoid: one big lane-dense matmul. ----
    M = T * B
    h_flat = h_seq.reshape(M, H)
    RB = min(row_block, M)
    M_pad = pl.cdiv(M, RB) * RB
    if M_pad != M:
        h_flat = jnp.pad(h_flat, ((0, M_pad - M), (0, 0)))

    wout_t = jnp.transpose(w_out).astype(jnp.float32)          # (H, Q)
    bout = b_out.reshape(1, Q).astype(jnp.float32)             # (1, Q)

    y_flat = pl.pallas_call(
        _proj_kernel,
        out_shape=jax.ShapeDtypeStruct((M_pad, Q), jnp.float32),
        grid_spec=pltpu.PrefetchScalarGridSpec(
            num_scalar_prefetch=0,
            grid=(M_pad // RB,),
            in_specs=[
                pl.BlockSpec((RB, H), lambda i: (i, 0)),
                pl.BlockSpec((H, Q), lambda i: (0, 0)),
                pl.BlockSpec((1, Q), lambda i: (0, 0)),
            ],
            out_specs=pl.BlockSpec((RB, Q), lambda i: (i, 0)),
        ),
        compiler_params=pltpu.CompilerParams(
            dimension_semantics=("parallel",),
        ),
    )(h_flat, wout_t, bout)

    y_tm = y_flat[:M].reshape(T, B, Q)
    return jnp.transpose(y_tm, (1, 0, 2))                      # (B, T, Q)


# ---------------------------------------------------------------------------
# Pure-JAX reference (lax.scan LSTM) for validation.
# ---------------------------------------------------------------------------
def dkt_forward_ref(q, r, params):
    emb_table = params["emb"]
    w_ih, w_hh = params["w_ih"], params["w_hh"]
    b_ih, b_hh = params["b_ih"], params["b_hh"]
    w_out, b_out = params["w_out"], params["b_out"]

    B, T = q.shape
    H = w_hh.shape[1]
    x_emb = jnp.take(emb_table, q + r, axis=0)            # (B, T, E)
    x_tm = jnp.transpose(x_emb, (1, 0, 2))                # (T, B, E)

    def step(carry, x_t):
        h, c = carry
        gates = x_t @ w_ih.T + h @ w_hh.T + b_ih + b_hh
        i = jax.nn.sigmoid(gates[:, 0 * H:1 * H])
        f = jax.nn.sigmoid(gates[:, 1 * H:2 * H])
        g = jnp.tanh(gates[:, 2 * H:3 * H])
        o = jax.nn.sigmoid(gates[:, 3 * H:4 * H])
        c_new = f * c + i * g
        h_new = o * jnp.tanh(c_new)
        return (h_new, c_new), h_new

    init = (jnp.zeros((B, H), jnp.float32), jnp.zeros((B, H), jnp.float32))
    _, h_seq = lax.scan(step, init, x_tm)                 # (T, B, H)
    y = jax.nn.sigmoid(h_seq @ w_out.T + b_out)           # (T, B, Q)
    return jnp.transpose(y, (1, 0, 2))


def init_params(key, num_q, emb_size, hidden_size):
    ks = jax.random.split(key, 7)
    scale = 0.1
    return {
        "emb": scale * jax.random.normal(ks[0], (num_q * 2, emb_size), jnp.float32),
        "w_ih": scale * jax.random.normal(ks[1], (4 * hidden_size, emb_size), jnp.float32),
        "w_hh": scale * jax.random.normal(ks[2], (4 * hidden_size, hidden_size), jnp.float32),
        "b_ih": scale * jax.random.normal(ks[3], (4 * hidden_size,), jnp.float32),
        "b_hh": scale * jax.random.normal(ks[4], (4 * hidden_size,), jnp.float32),
        "w_out": scale * jax.random.normal(ks[5], (num_q, hidden_size), jnp.float32),
        "b_out": scale * jax.random.normal(ks[6], (num_q,), jnp.float32),
    }


if __name__ == "__main__":
    num_q, emb_size, hidden_size = 16, 32, 32
    B, T = 2, 8

    key = jax.random.PRNGKey(0)
    k_p, k_q, k_r = jax.random.split(key, 3)
    params = init_params(k_p, num_q, emb_size, hidden_size)

    q = jax.random.randint(k_q, (B, T), 0, num_q, dtype=jnp.int32)
    r = jax.random.randint(k_r, (B, T), 0, 2, dtype=jnp.int32)

    y = jax.block_until_ready(dkt_forward(q, r, params))
    y_ref = jax.block_until_ready(dkt_forward_ref(q, r, params))

    assert y.shape == (B, T, num_q), y.shape
    assert jnp.allclose(y, y_ref, atol=2e-5, rtol=1e-4), (
        f"max abs err {jnp.max(jnp.abs(y - y_ref))}"
    )
    print("KERNEL_OK")
</pallas_src>

<mosaic_0001>
module attributes {stable_mosaic.version = 11 : i64} {
  func.func @_lstm_kernel(%arg0: i32, %arg1: i32, %arg2: memref<8x4x2x32xf32, #tpu.memory_space<vmem>>, %arg3: memref<4x32x32xf32, #tpu.memory_space<vmem>>, %arg4: memref<8x2x32xf32, #tpu.memory_space<vmem>>, %arg5: memref<2x32xf32, #tpu.memory_space<vmem>>, %arg6: memref<2x32xf32, #tpu.memory_space<vmem>>) attributes {dimension_semantics = [#tpu.dimension_semantics<parallel>, #tpu.dimension_semantics<arbitrary>], iteration_bounds = array<i64: 1, 1>, scalar_prefetch = 0 : i64, scratch_operands = 2 : i64, tpu.core_type = #tpu.core_type<tc>, window_params = [{transform_indices = @transform_0, window_bounds = array<i64: 8, 4, 2, 32>}, {pipeline_mode = #tpu.pipeline_mode<synchronous>, transform_indices = @transform_1, window_bounds = array<i64: 4, 32, 32>}, {transform_indices = @transform_2, window_bounds = array<i64: 8, 2, 32>}]} {
    %c0_i32 = arith.constant 0 : i32
    %0 = arith.cmpi eq, %arg1, %c0_i32 : i32
    %1 = arith.extui %0 : i1 to i32
    %c0_i32_0 = arith.constant 0 : i32
    %2 = arith.cmpi ne, %1, %c0_i32_0 : i32
    scf.if %2 {
      %cst_180 = arith.constant 0.000000e+00 : f32
      %379 = vector.broadcast %cst_180 : f32 to vector<2x32xf32>
      %c0_181 = arith.constant 0 : index
      %c0_182 = arith.constant 0 : index
      %380 = vector.load %arg5[%c0_181, %c0_182] : memref<2x32xf32, #tpu.memory_space<vmem>>, vector<2x32xf32>
      tpu.vector_store %arg5[%c0_181, %c0_182], %379 {strides = array<i32>} : memref<2x32xf32, #tpu.memory_space<vmem>>, vector<2x32xf32>,
      %cst_183 = arith.constant 0.000000e+00 : f32
      %381 = vector.broadcast %cst_183 : f32 to vector<2x32xf32>
      %c0_184 = arith.constant 0 : index
      %c0_185 = arith.constant 0 : index
      %382 = vector.load %arg6[%c0_184, %c0_185] : memref<2x32xf32, #tpu.memory_space<vmem>>, vector<2x32xf32>
      tpu.vector_store %arg6[%c0_184, %c0_185], %381 {strides = array<i32>} : memref<2x32xf32, #tpu.memory_space<vmem>>, vector<2x32xf32>,
    } else {
    }
    %c0 = arith.constant 0 : index
    %c0_1 = arith.constant 0 : index
    %c0_2 = arith.constant 0 : index
    %3 = vector.load %arg3[%c0, %c0_1, %c0_2] : memref<4x32x32xf32, #tpu.memory_space<vmem>>, vector<1x32x32xf32>
    %4 = vector.shape_cast %3 : vector<1x32x32xf32> to vector<32x32xf32>
    %c1 = arith.constant 1 : index
    %c0_3 = arith.constant 0 : index
    %c0_4 = arith.constant 0 : index
    %5 = vector.load %arg3[%c1, %c0_3, %c0_4] : memref<4x32x32xf32, #tpu.memory_space<vmem>>, vector<1x32x32xf32>
    %6 = vector.shape_cast %5 : vector<1x32x32xf32> to vector<32x32xf32>
    %c2 = arith.constant 2 : index
    %c0_5 = arith.constant 0 : index
    %c0_6 = arith.constant 0 : index
    %7 = vector.load %arg3[%c2, %c0_5, %c0_6] : memref<4x32x32xf32, #tpu.memory_space<vmem>>, vector<1x32x32xf32>
    %8 = vector.shape_cast %7 : vector<1x32x32xf32> to vector<32x32xf32>
    %c3 = arith.constant 3 : index
    %c0_7 = arith.constant 0 : index
    %c0_8 = arith.constant 0 : index
    %9 = vector.load %arg3[%c3, %c0_7, %c0_8] : memref<4x32x32xf32, #tpu.memory_space<vmem>>, vector<1x32x32xf32>
    %10 = vector.shape_cast %9 : vector<1x32x32xf32> to vector<32x32xf32>
    %c0_9 = arith.constant 0 : index
    %c0_10 = arith.constant 0 : index
    %11 = vector.load %arg5[%c0_9, %c0_10] : memref<2x32xf32, #tpu.memory_space<vmem>>, vector<2x32xf32>
    %c0_11 = arith.constant 0 : index
    %c0_12 = arith.constant 0 : index
    %12 = vector.load %arg6[%c0_11, %c0_12] : memref<2x32xf32, #tpu.memory_space<vmem>>, vector<2x32xf32>
    %c0_13 = arith.constant 0 : index
    %c0_14 = arith.constant 0 : index
    %c0_15 = arith.constant 0 : index
    %c0_16 = arith.constant 0 : index
    %13 = vector.load %arg2[%c0_13, %c0_14, %c0_15, %c0_16] : memref<8x4x2x32xf32, #tpu.memory_space<vmem>>, vector<1x4x2x32xf32>
    %14 = vector.shape_cast %13 : vector<1x4x2x32xf32> to vector<4x2x32xf32>
    %cst = arith.constant dense<0.000000e+00> : vector<2x32xf32>
    %15 = tpu.matmul %11, %4, %cst {dimension_numbers = #tpu.dot_dimension_numbers<[1], [0], [0], [1], [0, 0, 1, 1], [], []>} : vector<2x32xf32>, vector<32x32xf32>, vector<2x32xf32> -> vector<2x32xf32>
    %16 = vector.extract_strided_slice %14 {offsets = [0, 0, 0], sizes = [1, 2, 32], strides = [1, 1, 1]} : vector<4x2x32xf32> to vector<1x2x32xf32>
    %17 = vector.shape_cast %16 : vector<1x2x32xf32> to vector<2x32xf32>
    %18 = arith.addf %15, %17 : vector<2x32xf32>
    %19 = arith.negf %18 : vector<2x32xf32>
    %20 = math.exp %19 : vector<2x32xf32>
    %cst_17 = arith.constant 1.000000e+00 : f32
    %21 = vector.broadcast %cst_17 : f32 to vector<2x32xf32>
    %22 = arith.addf %21, %20 : vector<2x32xf32>
    %23 = arith.divf %21, %22 : vector<2x32xf32>
    %cst_18 = arith.constant dense<0.000000e+00> : vector<2x32xf32>
    %24 = tpu.matmul %11, %6, %cst_18 {dimension_numbers = #tpu.dot_dimension_numbers<[1], [0], [0], [1], [0, 0, 1, 1], [], []>} : vector<2x32xf32>, vector<32x32xf32>, vector<2x32xf32> -> vector<2x32xf32>
    %25 = vector.extract_strided_slice %14 {offsets = [1, 0, 0], sizes = [1, 2, 32], strides = [1, 1, 1]} : vector<4x2x32xf32> to vector<1x2x32xf32>
    %26 = vector.shape_cast %25 : vector<1x2x32xf32> to vector<2x32xf32>
    %27 = arith.addf %24, %26 : vector<2x32xf32>
    %28 = arith.negf %27 : vector<2x32xf32>
    %29 = math.exp %28 : vector<2x32xf32>
    %cst_19 = arith.constant 1.000000e+00 : f32
    %30 = vector.broadcast %cst_19 : f32 to vector<2x32xf32>
    %31 = arith.addf %30, %29 : vector<2x32xf32>
    %32 = arith.divf %30, %31 : vector<2x32xf32>
    %cst_20 = arith.constant dense<0.000000e+00> : vector<2x32xf32>
    %33 = tpu.matmul %11, %8, %cst_20 {dimension_numbers = #tpu.dot_dimension_numbers<[1], [0], [0], [1], [0, 0, 1, 1], [], []>} : vector<2x32xf32>, vector<32x32xf32>, vector<2x32xf32> -> vector<2x32xf32>
    %34 = vector.extract_strided_slice %14 {offsets = [2, 0, 0], sizes = [1, 2, 32], strides = [1, 1, 1]} : vector<4x2x32xf32> to vector<1x2x32xf32>
    %35 = vector.shape_cast %34 : vector<1x2x32xf32> to vector<2x32xf32>
    %36 = arith.addf %33, %35 : vector<2x32xf32>
    %37 = math.tanh %36 : vector<2x32xf32>
    %cst_21 = arith.constant dense<0.000000e+00> : vector<2x32xf32>
    %38 = tpu.matmul %11, %10, %cst_21 {dimension_numbers = #tpu.dot_dimension_numbers<[1], [0], [0], [1], [0, 0, 1, 1], [], []>} : vector<2x32xf32>, vector<32x32xf32>, vector<2x32xf32> -> vector<2x32xf32>
    %39 = vector.extract_strided_slice %14 {offsets = [3, 0, 0], sizes = [1, 2, 32], strides = [1, 1, 1]} : vector<4x2x32xf32> to vector<1x2x32xf32>
    %40 = vector.shape_cast %39 : vector<1x2x32xf32> to vector<2x32xf32>
    %41 = arith.addf %38, %40 : vector<2x32xf32>
    %42 = arith.negf %41 : vector<2x32xf32>
    %43 = math.exp %42 : vector<2x32xf32>
    %cst_22 = arith.constant 1.000000e+00 : f32
    %44 = vector.broadcast %cst_22 : f32 to vector<2x32xf32>
    %45 = arith.addf %44, %43 : vector<2x32xf32>
    %46 = arith.divf %44, %45 : vector<2x32xf32>
    %47 = arith.mulf %32, %12 : vector<2x32xf32>
    %48 = arith.mulf %23, %37 : vector<2x32xf32>
    %49 = arith.addf %47, %48 : vector<2x32xf32>
    %50 = math.tanh %49 : vector<2x32xf32>
    %51 = arith.mulf %46, %50 : vector<2x32xf32>
    %c0_23 = arith.constant 0 : index
    %c0_24 = arith.constant 0 : index
    %52 = vector.load %arg6[%c0_23, %c0_24] : memref<2x32xf32, #tpu.memory_space<vmem>>, vector<2x32xf32>
    tpu.vector_store %arg6[%c0_23, %c0_24], %49 {strides = array<i32>} : memref<2x32xf32, #tpu.memory_space<vmem>>, vector<2x32xf32>,
    %c0_25 = arith.constant 0 : index
    %c0_26 = arith.constant 0 : index
    %53 = vector.load %arg5[%c0_25, %c0_26] : memref<2x32xf32, #tpu.memory_space<vmem>>, vector<2x32xf32>
    tpu.vector_store %arg5[%c0_25, %c0_26], %51 {strides = array<i32>} : memref<2x32xf32, #tpu.memory_space<vmem>>, vector<2x32xf32>,
    %c0_27 = arith.constant 0 : index
    %c0_28 = arith.constant 0 : index
    %c0_29 = arith.constant 0 : index
    %54 = vector.load %arg4[%c0_27, %c0_28, %c0_29] : memref<8x2x32xf32, #tpu.memory_space<vmem>>, vector<1x2x32xf32>
    %55 = vector.shape_cast %54 : vector<1x2x32xf32> to vector<2x32xf32>
    %56 = vector.shape_cast %51 : vector<2x32xf32> to vector<1x2x32xf32>
    tpu.vector_store %arg4[%c0_27, %c0_28, %c0_29], %56 {strides = array<i32>} : memref<8x2x32xf32, #tpu.memory_space<vmem>>, vector<1x2x32xf32>,
    %c0_30 = arith.constant 0 : index
    %c0_31 = arith.constant 0 : index
    %57 = vector.load %arg5[%c0_30, %c0_31] : memref<2x32xf32, #tpu.memory_space<vmem>>, vector<2x32xf32>
    %c0_32 = arith.constant 0 : index
    %c0_33 = arith.constant 0 : index
    %58 = vector.load %arg6[%c0_32, %c0_33] : memref<2x32xf32, #tpu.memory_space<vmem>>, vector<2x32xf32>
    %c1_34 = arith.constant 1 : index
    %c0_35 = arith.constant 0 : index
    %c0_36 = arith.constant 0 : index
    %c0_37 = arith.constant 0 : index
    %59 = vector.load %arg2[%c1_34, %c0_35, %c0_36, %c0_37] : memref<8x4x2x32xf32, #tpu.memory_space<vmem>>, vector<1x4x2x32xf32>
    %60 = vector.shape_cast %59 : vector<1x4x2x32xf32> to vector<4x2x32xf32>
    %cst_38 = arith.constant dense<0.000000e+00> : vector<2x32xf32>
    %61 = tpu.matmul %57, %4, %cst_38 {dimension_numbers = #tpu.dot_dimension_numbers<[1], [0], [0], [1], [0, 0, 1, 1], [], []>} : vector<2x32xf32>, vector<32x32xf32>, vector<2x32xf32> -> vector<2x32xf32>
    %62 = vector.extract_strided_slice %60 {offsets = [0, 0, 0], sizes = [1, 2, 32], strides = [1, 1, 1]} : vector<4x2x32xf32> to vector<1x2x32xf32>
    %63 = vector.shape_cast %62 : vector<1x2x32xf32> to vector<2x32xf32>
    %64 = arith.addf %61, %63 : vector<2x32xf32>
    %65 = arith.negf %64 : vector<2x32xf32>
    %66 = math.exp %65 : vector<2x32xf32>
    %cst_39 = arith.constant 1.000000e+00 : f32
    %67 = vector.broadcast %cst_39 : f32 to vector<2x32xf32>
    %68 = arith.addf %67, %66 : vector<2x32xf32>
    %69 = arith.divf %67, %68 : vector<2x32xf32>
    %cst_40 = arith.constant dense<0.000000e+00> : vector<2x32xf32>
    %70 = tpu.matmul %57, %6, %cst_40 {dimension_numbers = #tpu.dot_dimension_numbers<[1], [0], [0], [1], [0, 0, 1, 1], [], []>} : vector<2x32xf32>, vector<32x32xf32>, vector<2x32xf32> -> vector<2x32xf32>
    %71 = vector.extract_strided_slice %60 {offsets = [1, 0, 0], sizes = [1, 2, 32], strides = [1, 1, 1]} : vector<4x2x32xf32> to vector<1x2x32xf32>
    %72 = vector.shape_cast %71 : vector<1x2x32xf32> to vector<2x32xf32>
    %73 = arith.addf %70, %72 : vector<2x32xf32>
    %74 = arith.negf %73 : vector<2x32xf32>
    %75 = math.exp %74 : vector<2x32xf32>
    %cst_41 = arith.constant 1.000000e+00 : f32
    %76 = vector.broadcast %cst_41 : f32 to vector<2x32xf32>
    %77 = arith.addf %76, %75 : vector<2x32xf32>
    %78 = arith.divf %76, %77 : vector<2x32xf32>
    %cst_42 = arith.constant dense<0.000000e+00> : vector<2x32xf32>
    %79 = tpu.matmul %57, %8, %cst_42 {dimension_numbers = #tpu.dot_dimension_numbers<[1], [0], [0], [1], [0, 0, 1, 1], [], []>} : vector<2x32xf32>, vector<32x32xf32>, vector<2x32xf32> -> vector<2x32xf32>
    %80 = vector.extract_strided_slice %60 {offsets = [2, 0, 0], sizes = [1, 2, 32], strides = [1, 1, 1]} : vector<4x2x32xf32> to vector<1x2x32xf32>
    %81 = vector.shape_cast %80 : vector<1x2x32xf32> to vector<2x32xf32>
    %82 = arith.addf %79, %81 : vector<2x32xf32>
    %83 = math.tanh %82 : vector<2x32xf32>
    %cst_43 = arith.constant dense<0.000000e+00> : vector<2x32xf32>
    %84 = tpu.matmul %57, %10, %cst_43 {dimension_numbers = #tpu.dot_dimension_numbers<[1], [0], [0], [1], [0, 0, 1, 1], [], []>} : vector<2x32xf32>, vector<32x32xf32>, vector<2x32xf32> -> vector<2x32xf32>
    %85 = vector.extract_strided_slice %60 {offsets = [3, 0, 0], sizes = [1, 2, 32], strides = [1, 1, 1]} : vector<4x2x32xf32> to vector<1x2x32xf32>
    %86 = vector.shape_cast %85 : vector<1x2x32xf32> to vector<2x32xf32>
    %87 = arith.addf %84, %86 : vector<2x32xf32>
    %88 = arith.negf %87 : vector<2x32xf32>
    %89 = math.exp %88 : vector<2x32xf32>
    %cst_44 = arith.constant 1.000000e+00 : f32
    %90 = vector.broadcast %cst_44 : f32 to vector<2x32xf32>
    %91 = arith.addf %90, %89 : vector<2x32xf32>
    %92 = arith.divf %90, %91 : vector<2x32xf32>
    %93 = arith.mulf %78, %58 : vector<2x32xf32>
    %94 = arith.mulf %69, %83 : vector<2x32xf32>
    %95 = arith.addf %93, %94 : vector<2x32xf32>
    %96 = math.tanh %95 : vector<2x32xf32>
    %97 = arith.mulf %92, %96 : vector<2x32xf32>
    %c0_45 = arith.constant 0 : index
    %c0_46 = arith.constant 0 : index
    %98 = vector.load %arg6[%c0_45, %c0_46] : memref<2x32xf32, #tpu.memory_space<vmem>>, vector<2x32xf32>
    tpu.vector_store %arg6[%c0_45, %c0_46], %95 {strides = array<i32>} : memref<2x32xf32, #tpu.memory_space<vmem>>, vector<2x32xf32>,
    %c0_47 = arith.constant 0 : index
    %c0_48 = arith.constant 0 : index
    %99 = vector.load %arg5[%c0_47, %c0_48] : memref<2x32xf32, #tpu.memory_space<vmem>>, vector<2x32xf32>
    tpu.vector_store %arg5[%c0_47, %c0_48], %97 {strides = array<i32>} : memref<2x32xf32, #tpu.memory_space<vmem>>, vector<2x32xf32>,
    %c1_49 = arith.constant 1 : index
    %c0_50 = arith.constant 0 : index
    %c0_51 = arith.constant 0 : index
    %100 = vector.load %arg4[%c1_49, %c0_50, %c0_51] : memref<8x2x32xf32, #tpu.memory_space<vmem>>, vector<1x2x32xf32>
    %101 = vector.shape_cast %100 : vector<1x2x32xf32> to vector<2x32xf32>
    %102 = vector.shape_cast %97 : vector<2x32xf32> to vector<1x2x32xf32>
    tpu.vector_store %arg4[%c1_49, %c0_50, %c0_51], %102 {strides = array<i32>} : memref<8x2x32xf32, #tpu.memory_space<vmem>>, vector<1x2x32xf32>,
    %c0_52 = arith.constant 0 : index
    %c0_53 = arith.constant 0 : index
    %103 = vector.load %arg5[%c0_52, %c0_53] : memref<2x32xf32, #tpu.memory_space<vmem>>, vector<2x32xf32>
    %c0_54 = arith.constant 0 : index
    %c0_55 = arith.constant 0 : index
    %104 = vector.load %arg6[%c0_54, %c0_55] : memref<2x32xf32, #tpu.memory_space<vmem>>, vector<2x32xf32>
    %c2_56 = arith.constant 2 : index
    %c0_57 = arith.constant 0 : index
    %c0_58 = arith.constant 0 : index
    %c0_59 = arith.constant 0 : index
    %105 = vector.load %arg2[%c2_56, %c0_57, %c0_58, %c0_59] : memref<8x4x2x32xf32, #tpu.memory_space<vmem>>, vector<1x4x2x32xf32>
    %106 = vector.shape_cast %105 : vector<1x4x2x32xf32> to vector<4x2x32xf32>
    %cst_60 = arith.constant dense<0.000000e+00> : vector<2x32xf32>
    %107 = tpu.matmul %103, %4, %cst_60 {dimension_numbers = #tpu.dot_dimension_numbers<[1], [0], [0], [1], [0, 0, 1, 1], [], []>} : vector<2x32xf32>, vector<32x32xf32>, vector<2x32xf32> -> vector<2x32xf32>
    %108 = vector.extract_strided_slice %106 {offsets = [0, 0, 0], sizes = [1, 2, 32], strides = [1, 1, 1]} : vector<4x2x32xf32> to vector<1x2x32xf32>
    %109 = vector.shape_cast %108 : vector<1x2x32xf32> to vector<2x32xf32>
    %110 = arith.addf %107, %109 : vector<2x32xf32>
    %111 = arith.negf %110 : vector<2x32xf32>
    %112 = math.exp %111 : vector<2x32xf32>
    %cst_61 = arith.constant 1.000000e+00 : f32
    %113 = vector.broadcast %cst_61 : f32 to vector<2x32xf32>
    %114 = arith.addf %113, %112 : vector<2x32xf32>
    %115 = arith.divf %113, %114 : vector<2x32xf32>
    %cst_62 = arith.constant dense<0.000000e+00> : vector<2x32xf32>
    %116 = tpu.matmul %103, %6, %cst_62 {dimension_numbers = #tpu.dot_dimension_numbers<[1], [0], [0], [1], [0, 0, 1, 1], [], []>} : vector<2x32xf32>, vector<32x32xf32>, vector<2x32xf32> -> vector<2x32xf32>
    %117 = vector.extract_strided_slice %106 {offsets = [1, 0, 0], sizes = [1, 2, 32], strides = [1, 1, 1]} : vector<4x2x32xf32> to vector<1x2x32xf32>
    %118 = vector.shape_cast %117 : vector<1x2x32xf32> to vector<2x32xf32>
    %119 = arith.addf %116, %118 : vector<2x32xf32>
    %120 = arith.negf %119 : vector<2x32xf32>
    %121 = math.exp %120 : vector<2x32xf32>
    %cst_63 = arith.constant 1.000000e+00 : f32
    %122 = vector.broadcast %cst_63 : f32 to vector<2x32xf32>
    %123 = arith.addf %122, %121 : vector<2x32xf32>
    %124 = arith.divf %122, %123 : vector<2x32xf32>
    %cst_64 = arith.constant dense<0.000000e+00> : vector<2x32xf32>
    %125 = tpu.matmul %103, %8, %cst_64 {dimension_numbers = #tpu.dot_dimension_numbers<[1], [0], [0], [1], [0, 0, 1, 1], [], []>} : vector<2x32xf32>, vector<32x32xf32>, vector<2x32xf32> -> vector<2x32xf32>
    %126 = vector.extract_strided_slice %106 {offsets = [2, 0, 0], sizes = [1, 2, 32], strides = [1, 1, 1]} : vector<4x2x32xf32> to vector<1x2x32xf32>
    %127 = vector.shape_cast %126 : vector<1x2x32xf32> to vector<2x32xf32>
    %128 = arith.addf %125, %127 : vector<2x32xf32>
    %129 = math.tanh %128 : vector<2x32xf32>
    %cst_65 = arith.constant dense<0.000000e+00> : vector<2x32xf32>
    %130 = tpu.matmul %103, %10, %cst_65 {dimension_numbers = #tpu.dot_dimension_numbers<[1], [0], [0], [1], [0, 0, 1, 1], [], []>} : vector<2x32xf32>, vector<32x32xf32>, vector<2x32xf32> -> vector<2x32xf32>
    %131 = vector.extract_strided_slice %106 {offsets = [3, 0, 0], sizes = [1, 2, 32], strides = [1, 1, 1]} : vector<4x2x32xf32> to vector<1x2x32xf32>
    %132 = vector.shape_cast %131 : vector<1x2x32xf32> to vector<2x32xf32>
    %133 = arith.addf %130, %132 : vector<2x32xf32>
    %134 = arith.negf %133 : vector<2x32xf32>
    %135 = math.exp %134 : vector<2x32xf32>
    %cst_66 = arith.constant 1.000000e+00 : f32
    %136 = vector.broadcast %cst_66 : f32 to vector<2x32xf32>
    %137 = arith.addf %136, %135 : vector<2x32xf32>
    %138 = arith.divf %136, %137 : vector<2x32xf32>
    %139 = arith.mulf %124, %104 : vector<2x32xf32>
    %140 = arith.mulf %115, %129 : vector<2x32xf32>
    %141 = arith.addf %139, %140 : vector<2x32xf32>
    %142 = math.tanh %141 : vector<2x32xf32>
    %143 = arith.mulf %138, %142 : vector<2x32xf32>
    %c0_67 = arith.constant 0 : index
    %c0_68 = arith.constant 0 : index
    %144 = vector.load %arg6[%c0_67, %c0_68] : memref<2x32xf32, #tpu.memory_space<vmem>>, vector<2x32xf32>
    tpu.vector_store %arg6[%c0_67, %c0_68], %141 {strides = array<i32>} : memref<2x32xf32, #tpu.memory_space<vmem>>, vector<2x32xf32>,
    %c0_69 = arith.constant 0 : index
    %c0_70 = arith.constant 0 : index
    %145 = vector.load %arg5[%c0_69, %c0_70] : memref<2x32xf32, #tpu.memory_space<vmem>>, vector<2x32xf32>
    tpu.vector_store %arg5[%c0_69, %c0_70], %143 {strides = array<i32>} : memref<2x32xf32, #tpu.memory_space<vmem>>, vector<2x32xf32>,
    %c2_71 = arith.constant 2 : index
    %c0_72 = arith.constant 0 : index
    %c0_73 = arith.constant 0 : index
    %146 = vector.load %arg4[%c2_71, %c0_72, %c0_73] : memref<8x2x32xf32, #tpu.memory_space<vmem>>, vector<1x2x32xf32>
    %147 = vector.shape_cast %146 : vector<1x2x32xf32> to vector<2x32xf32>
    %148 = vector.shape_cast %143 : vector<2x32xf32> to vector<1x2x32xf32>
    tpu.vector_store %arg4[%c2_71, %c0_72, %c0_73], %148 {strides = array<i32>} : memref<8x2x32xf32, #tpu.memory_space<vmem>>, vector<1x2x32xf32>,
    %c0_74 = arith.constant 0 : index
    %c0_75 = arith.constant 0 : index
    %149 = vector.load %arg5[%c0_74, %c0_75] : memref<2x32xf32, #tpu.memory_space<vmem>>, vector<2x32xf32>
    %c0_76 = arith.constant 0 : index
    %c0_77 = arith.constant 0 : index
    %150 = vector.load %arg6[%c0_76, %c0_77] : memref<2x32xf32, #tpu.memory_space<vmem>>, vector<2x32xf32>
    %c3_78 = arith.constant 3 : index
    %c0_79 = arith.constant 0 : index
    %c0_80 = arith.constant 0 : index
    %c0_81 = arith.constant 0 : index
    %151 = vector.load %arg2[%c3_78, %c0_79, %c0_80, %c0_81] : memref<8x4x2x32xf32, #tpu.memory_space<vmem>>, vector<1x4x2x32xf32>
    %152 = vector.shape_cast %151 : vector<1x4x2x32xf32> to vector<4x2x32xf32>
    %cst_82 = arith.constant dense<0.000000e+00> : vector<2x32xf32>
    %153 = tpu.matmul %149, %4, %cst_82 {dimension_numbers = #tpu.dot_dimension_numbers<[1], [0], [0], [1], [0, 0, 1, 1], [], []>} : vector<2x32xf32>, vector<32x32xf32>, vector<2x32xf32> -> vector<2x32xf32>
    %154 = vector.extract_strided_slice %152 {offsets = [0, 0, 0], sizes = [1, 2, 32], strides = [1, 1, 1]} : vector<4x2x32xf32> to vector<1x2x32xf32>
    %155 = vector.shape_cast %154 : vector<1x2x32xf32> to vector<2x32xf32>
    %156 = arith.addf %153, %155 : vector<2x32xf32>
    %157 = arith.negf %156 : vector<2x32xf32>
    %158 = math.exp %157 : vector<2x32xf32>
    %cst_83 = arith.constant 1.000000e+00 : f32
    %159 = vector.broadcast %cst_83 : f32 to vector<2x32xf32>
    %160 = arith.addf %159, %158 : vector<2x32xf32>
    %161 = arith.divf %159, %160 : vector<2x32xf32>
    %cst_84 = arith.constant dense<0.000000e+00> : vector<2x32xf32>
    %162 = tpu.matmul %149, %6, %cst_84 {dimension_numbers = #tpu.dot_dimension_numbers<[1], [0], [0], [1], [0, 0, 1, 1], [], []>} : vector<2x32xf32>, vector<32x32xf32>, vector<2x32xf32> -> vector<2x32xf32>
    %163 = vector.extract_strided_slice %152 {offsets = [1, 0, 0], sizes = [1, 2, 32], strides = [1, 1, 1]} : vector<4x2x32xf32> to vector<1x2x32xf32>
    %164 = vector.shape_cast %163 : vector<1x2x32xf32> to vector<2x32xf32>
    %165 = arith.addf %162, %164 : vector<2x32xf32>
    %166 = arith.negf %165 : vector<2x32xf32>
    %167 = math.exp %166 : vector<2x32xf32>
    %cst_85 = arith.constant 1.000000e+00 : f32
    %168 = vector.broadcast %cst_85 : f32 to vector<2x32xf32>
    %169 = arith.addf %168, %167 : vector<2x32xf32>
    %170 = arith.divf %168, %169 : vector<2x32xf32>
    %cst_86 = arith.constant dense<0.000000e+00> : vector<2x32xf32>
    %171 = tpu.matmul %149, %8, %cst_86 {dimension_numbers = #tpu.dot_dimension_numbers<[1], [0], [0], [1], [0, 0, 1, 1], [], []>} : vector<2x32xf32>, vector<32x32xf32>, vector<2x32xf32> -> vector<2x32xf32>
    %172 = vector.extract_strided_slice %152 {offsets = [2, 0, 0], sizes = [1, 2, 32], strides = [1, 1, 1]} : vector<4x2x32xf32> to vector<1x2x32xf32>
    %173 = vector.shape_cast %172 : vector<1x2x32xf32> to vector<2x32xf32>
    %174 = arith.addf %171, %173 : vector<2x32xf32>
    %175 = math.tanh %174 : vector<2x32xf32>
    %cst_87 = arith.constant dense<0.000000e+00> : vector<2x32xf32>
    %176 = tpu.matmul %149, %10, %cst_87 {dimension_numbers = #tpu.dot_dimension_numbers<[1], [0], [0], [1], [0, 0, 1, 1], [], []>} : vector<2x32xf32>, vector<32x32xf32>, vector<2x32xf32> -> vector<2x32xf32>
    %177 = vector.extract_strided_slice %152 {offsets = [3, 0, 0], sizes = [1, 2, 32], strides = [1, 1, 1]} : vector<4x2x32xf32> to vector<1x2x32xf32>
    %178 = vector.shape_cast %177 : vector<1x2x32xf32> to vector<2x32xf32>
    %179 = arith.addf %176, %178 : vector<2x32xf32>
    %180 = arith.negf %179 : vector<2x32xf32>
    %181 = math.exp %180 : vector<2x32xf32>
    %cst_88 = arith.constant 1.000000e+00 : f32
    %182 = vector.broadcast %cst_88 : f32 to vector<2x32xf32>
    %183 = arith.addf %182, %181 : vector<2x32xf32>
    %184 = arith.divf %182, %183 : vector<2x32xf32>
    %185 = arith.mulf %170, %150 : vector<2x32xf32>
    %186 = arith.mulf %161, %175 : vector<2x32xf32>
    %187 = arith.addf %185, %186 : vector<2x32xf32>
    %188 = math.tanh %187 : vector<2x32xf32>
    %189 = arith.mulf %184, %188 : vector<2x32xf32>
    %c0_89 = arith.constant 0 : index
    %c0_90 = arith.constant 0 : index
    %190 = vector.load %arg6[%c0_89, %c0_90] : memref<2x32xf32, #tpu.memory_space<vmem>>, vector<2x32xf32>
    tpu.vector_store %arg6[%c0_89, %c0_90], %187 {strides = array<i32>} : memref<2x32xf32, #tpu.memory_space<vmem>>, vector<2x32xf32>,
    %c0_91 = arith.constant 0 : index
    %c0_92 = arith.constant 0 : index
    %191 = vector.load %arg5[%c0_91, %c0_92] : memref<2x32xf32, #tpu.memory_space<vmem>>, vector<2x32xf32>
    tpu.vector_store %arg5[%c0_91, %c0_92], %189 {strides = array<i32>} : memref<2x32xf32, #tpu.memory_space<vmem>>, vector<2x32xf32>,
    %c3_93 = arith.constant 3 : index
    %c0_94 = arith.constant 0 : index
    %c0_95 = arith.constant 0 : index
    %192 = vector.load %arg4[%c3_93, %c0_94, %c0_95] : memref<8x2x32xf32, #tpu.memory_space<vmem>>, vector<1x2x32xf32>
    %193 = vector.shape_cast %192 : vector<1x2x32xf32> to vector<2x32xf32>
    %194 = vector.shape_cast %189 : vector<2x32xf32> to vector<1x2x32xf32>
    tpu.vector_store %arg4[%c3_93, %c0_94, %c0_95], %194 {strides = array<i32>} : memref<8x2x32xf32, #tpu.memory_space<vmem>>, vector<1x2x32xf32>,
    %c0_96 = arith.constant 0 : index
    %c0_97 = arith.constant 0 : index
    %195 = vector.load %arg5[%c0_96, %c0_97] : memref<2x32xf32, #tpu.memory_space<vmem>>, vector<2x32xf32>
    %c0_98 = arith.constant 0 : index
    %c0_99 = arith.constant 0 : index
    %196 = vector.load %arg6[%c0_98, %c0_99] : memref<2x32xf32, #tpu.memory_space<vmem>>, vector<2x32xf32>
    %c4 = arith.constant 4 : index
    %c0_100 = arith.constant 0 : index
    %c0_101 = arith.constant 0 : index
    %c0_102 = arith.constant 0 : index
    %197 = vector.load %arg2[%c4, %c0_100, %c0_101, %c0_102] : memref<8x4x2x32xf32, #tpu.memory_space<vmem>>, vector<1x4x2x32xf32>
    %198 = vector.shape_cast %197 : vector<1x4x2x32xf32> to vector<4x2x32xf32>
    %cst_103 = arith.constant dense<0.000000e+00> : vector<2x32xf32>
    %199 = tpu.matmul %195, %4, %cst_103 {dimension_numbers = #tpu.dot_dimension_numbers<[1], [0], [0], [1], [0, 0, 1, 1], [], []>} : vector<2x32xf32>, vector<32x32xf32>, vector<2x32xf32> -> vector<2x32xf32>
    %200 = vector.extract_strided_slice %198 {offsets = [0, 0, 0], sizes = [1, 2, 32], strides = [1, 1, 1]} : vector<4x2x32xf32> to vector<1x2x32xf32>
    %201 = vector.shape_cast %200 : vector<1x2x32xf32> to vector<2x32xf32>
    %202 = arith.addf %199, %201 : vector<2x32xf32>
    %203 = arith.negf %202 : vector<2x32xf32>
    %204 = math.exp %203 : vector<2x32xf32>
    %cst_104 = arith.constant 1.000000e+00 : f32
    %205 = vector.broadcast %cst_104 : f32 to vector<2x32xf32>
    %206 = arith.addf %205, %204 : vector<2x32xf32>
    %207 = arith.divf %205, %206 : vector<2x32xf32>
    %cst_105 = arith.constant dense<0.000000e+00> : vector<2x32xf32>
    %208 = tpu.matmul %195, %6, %cst_105 {dimension_numbers = #tpu.dot_dimension_numbers<[1], [0], [0], [1], [0, 0, 1, 1], [], []>} : vector<2x32xf32>, vector<32x32xf32>, vector<2x32xf32> -> vector<2x32xf32>
    %209 = vector.extract_strided_slice %198 {offsets = [1, 0, 0], sizes = [1, 2, 32], strides = [1, 1, 1]} : vector<4x2x32xf32> to vector<1x2x32xf32>
    %210 = vector.shape_cast %209 : vector<1x2x32xf32> to vector<2x32xf32>
    %211 = arith.addf %208, %210 : vector<2x32xf32>
    %212 = arith.negf %211 : vector<2x32xf32>
    %213 = math.exp %212 : vector<2x32xf32>
    %cst_106 = arith.constant 1.000000e+00 : f32
    %214 = vector.broadcast %cst_106 : f32 to vector<2x32xf32>
    %215 = arith.addf %214, %213 : vector<2x32xf32>
    %216 = arith.divf %214, %215 : vector<2x32xf32>
    %cst_107 = arith.constant dense<0.000000e+00> : vector<2x32xf32>
    %217 = tpu.matmul %195, %8, %cst_107 {dimension_numbers = #tpu.dot_dimension_numbers<[1], [0], [0], [1], [0, 0, 1, 1], [], []>} : vector<2x32xf32>, vector<32x32xf32>, vector<2x32xf32> -> vector<2x32xf32>
    %218 = vector.extract_strided_slice %198 {offsets = [2, 0, 0], sizes = [1, 2, 32], strides = [1, 1, 1]} : vector<4x2x32xf32> to vector<1x2x32xf32>
    %219 = vector.shape_cast %218 : vector<1x2x32xf32> to vector<2x32xf32>
    %220 = arith.addf %217, %219 : vector<2x32xf32>
    %221 = math.tanh %220 : vector<2x32xf32>
    %cst_108 = arith.constant dense<0.000000e+00> : vector<2x32xf32>
    %222 = tpu.matmul %195, %10, %cst_108 {dimension_numbers = #tpu.dot_dimension_numbers<[1], [0], [0], [1], [0, 0, 1, 1], [], []>} : vector<2x32xf32>, vector<32x32xf32>, vector<2x32xf32> -> vector<2x32xf32>
    %223 = vector.extract_strided_slice %198 {offsets = [3, 0, 0], sizes = [1, 2, 32], strides = [1, 1, 1]} : vector<4x2x32xf32> to vector<1x2x32xf32>
    %224 = vector.shape_cast %223 : vector<1x2x32xf32> to vector<2x32xf32>
    %225 = arith.addf %222, %224 : vector<2x32xf32>
    %226 = arith.negf %225 : vector<2x32xf32>
    %227 = math.exp %226 : vector<2x32xf32>
    %cst_109 = arith.constant 1.000000e+00 : f32
    %228 = vector.broadcast %cst_109 : f32 to vector<2x32xf32>
    %229 = arith.addf %228, %227 : vector<2x32xf32>
    %230 = arith.divf %228, %229 : vector<2x32xf32>
    %231 = arith.mulf %216, %196 : vector<2x32xf32>
    %232 = arith.mulf %207, %221 : vector<2x32xf32>
    %233 = arith.addf %231, %232 : vector<2x32xf32>
    %234 = math.tanh %233 : vector<2x32xf32>
    %235 = arith.mulf %230, %234 : vector<2x32xf32>
    %c0_110 = arith.constant 0 : index
    %c0_111 = arith.constant 0 : index
    %236 = vector.load %arg6[%c0_110, %c0_111] : memref<2x32xf32, #tpu.memory_space<vmem>>, vector<2x32xf32>
    tpu.vector_store %arg6[%c0_110, %c0_111], %233 {strides = array<i32>} : memref<2x32xf32, #tpu.memory_space<vmem>>, vector<2x32xf32>,
    %c0_112 = arith.constant 0 : index
    %c0_113 = arith.constant 0 : index
    %237 = vector.load %arg5[%c0_112, %c0_113] : memref<2x32xf32, #tpu.memory_space<vmem>>, vector<2x32xf32>
    tpu.vector_store %arg5[%c0_112, %c0_113], %235 {strides = array<i32>} : memref<2x32xf32, #tpu.memory_space<vmem>>, vector<2x32xf32>,
    %c4_114 = arith.constant 4 : index
    %c0_115 = arith.constant 0 : index
    %c0_116 = arith.constant 0 : index
    %238 = vector.load %arg4[%c4_114, %c0_115, %c0_116] : memref<8x2x32xf32, #tpu.memory_space<vmem>>, vector<1x2x32xf32>
    %239 = vector.shape_cast %238 : vector<1x2x32xf32> to vector<2x32xf32>
    %240 = vector.shape_cast %235 : vector<2x32xf32> to vector<1x2x32xf32>
    tpu.vector_store %arg4[%c4_114, %c0_115, %c0_116], %240 {strides = array<i32>} : memref<8x2x32xf32, #tpu.memory_space<vmem>>, vector<1x2x32xf32>,
    %c0_117 = arith.constant 0 : index
    %c0_118 = arith.constant 0 : index
    %241 = vector.load %arg5[%c0_117, %c0_118] : memref<2x32xf32, #tpu.memory_space<vmem>>, vector<2x32xf32>
    %c0_119 = arith.constant 0 : index
    %c0_120 = arith.constant 0 : index
    %242 = vector.load %arg6[%c0_119, %c0_120] : memref<2x32xf32, #tpu.memory_space<vmem>>, vector<2x32xf32>
    %c5 = arith.constant 5 : index
    %c0_121 = arith.constant 0 : index
    %c0_122 = arith.constant 0 : index
    %c0_123 = arith.constant 0 : index
    %243 = vector.load %arg2[%c5, %c0_121, %c0_122, %c0_123] : memref<8x4x2x32xf32, #tpu.memory_space<vmem>>, vector<1x4x2x32xf32>
    %244 = vector.shape_cast %243 : vector<1x4x2x32xf32> to vector<4x2x32xf32>
    %cst_124 = arith.constant dense<0.000000e+00> : vector<2x32xf32>
    %245 = tpu.matmul %241, %4, %cst_124 {dimension_numbers = #tpu.dot_dimension_numbers<[1], [0], [0], [1], [0, 0, 1, 1], [], []>} : vector<2x32xf32>, vector<32x32xf32>, vector<2x32xf32> -> vector<2x32xf32>
    %246 = vector.extract_strided_slice %244 {offsets = [0, 0, 0], sizes = [1, 2, 32], strides = [1, 1, 1]} : vector<4x2x32xf32> to vector<1x2x32xf32>
    %247 = vector.shape_cast %246 : vector<1x2x32xf32> to vector<2x32xf32>
    %248 = arith.addf %245, %247 : vector<2x32xf32>
    %249 = arith.negf %248 : vector<2x32xf32>
    %250 = math.exp %249 : vector<2x32xf32>
    %cst_125 = arith.constant 1.000000e+00 : f32
    %251 = vector.broadcast %cst_125 : f32 to vector<2x32xf32>
    %252 = arith.addf %251, %250 : vector<2x32xf32>
    %253 = arith.divf %251, %252 : vector<2x32xf32>
    %cst_126 = arith.constant dense<0.000000e+00> : vector<2x32xf32>
    %254 = tpu.matmul %241, %6, %cst_126 {dimension_numbers = #tpu.dot_dimension_numbers<[1], [0], [0], [1], [0, 0, 1, 1], [], []>} : vector<2x32xf32>, vector<32x32xf32>, vector<2x32xf32> -> vector<2x32xf32>
    %255 = vector.extract_strided_slice %244 {offsets = [1, 0, 0], sizes = [1, 2, 32], strides = [1, 1, 1]} : vector<4x2x32xf32> to vector<1x2x32xf32>
    %256 = vector.shape_cast %255 : vector<1x2x32xf32> to vector<2x32xf32>
    %257 = arith.addf %254, %256 : vector<2x32xf32>
    %258 = arith.negf %257 : vector<2x32xf32>
    %259 = math.exp %258 : vector<2x32xf32>
    %cst_127 = arith.constant 1.000000e+00 : f32
    %260 = vector.broadcast %cst_127 : f32 to vector<2x32xf32>
    %261 = arith.addf %260, %259 : vector<2x32xf32>
    %262 = arith.divf %260, %261 : vector<2x32xf32>
    %cst_128 = arith.constant dense<0.000000e+00> : vector<2x32xf32>
    %263 = tpu.matmul %241, %8, %cst_128 {dimension_numbers = #tpu.dot_dimension_numbers<[1], [0], [0], [1], [0, 0, 1, 1], [], []>} : vector<2x32xf32>, vector<32x32xf32>, vector<2x32xf32> -> vector<2x32xf32>
    %264 = vector.extract_strided_slice %244 {offsets = [2, 0, 0], sizes = [1, 2, 32], strides = [1, 1, 1]} : vector<4x2x32xf32> to vector<1x2x32xf32>
    %265 = vector.shape_cast %264 : vector<1x2x32xf32> to vector<2x32xf32>
    %266 = arith.addf %263, %265 : vector<2x32xf32>
    %267 = math.tanh %266 : vector<2x32xf32>
    %cst_129 = arith.constant dense<0.000000e+00> : vector<2x32xf32>
    %268 = tpu.matmul %241, %10, %cst_129 {dimension_numbers = #tpu.dot_dimension_numbers<[1], [0], [0], [1], [0, 0, 1, 1], [], []>} : vector<2x32xf32>, vector<32x32xf32>, vector<2x32xf32> -> vector<2x32xf32>
    %269 = vector.extract_strided_slice %244 {offsets = [3, 0, 0], sizes = [1, 2, 32], strides = [1, 1, 1]} : vector<4x2x32xf32> to vector<1x2x32xf32>
    %270 = vector.shape_cast %269 : vector<1x2x32xf32> to vector<2x32xf32>
    %271 = arith.addf %268, %270 : vector<2x32xf32>
    %272 = arith.negf %271 : vector<2x32xf32>
    %273 = math.exp %272 : vector<2x32xf32>
    %cst_130 = arith.constant 1.000000e+00 : f32
    %274 = vector.broadcast %cst_130 : f32 to vector<2x32xf32>
    %275 = arith.addf %274, %273 : vector<2x32xf32>
    %276 = arith.divf %274, %275 : vector<2x32xf32>
    %277 = arith.mulf %262, %242 : vector<2x32xf32>
    %278 = arith.mulf %253, %267 : vector<2x32xf32>
    %279 = arith.addf %277, %278 : vector<2x32xf32>
    %280 = math.tanh %279 : vector<2x32xf32>
    %281 = arith.mulf %276, %280 : vector<2x32xf32>
    %c0_131 = arith.constant 0 : index
    %c0_132 = arith.constant 0 : index
    %282 = vector.load %arg6[%c0_131, %c0_132] : memref<2x32xf32, #tpu.memory_space<vmem>>, vector<2x32xf32>
    tpu.vector_store %arg6[%c0_131, %c0_132], %279 {strides = array<i32>} : memref<2x32xf32, #tpu.memory_space<vmem>>, vector<2x32xf32>,
    %c0_133 = arith.constant 0 : index
    %c0_134 = arith.constant 0 : index
    %283 = vector.load %arg5[%c0_133, %c0_134] : memref<2x32xf32, #tpu.memory_space<vmem>>, vector<2x32xf32>
    tpu.vector_store %arg5[%c0_133, %c0_134], %281 {strides = array<i32>} : memref<2x32xf32, #tpu.memory_space<vmem>>, vector<2x32xf32>,
    %c5_135 = arith.constant 5 : index
    %c0_136 = arith.constant 0 : index
    %c0_137 = arith.constant 0 : index
    %284 = vector.load %arg4[%c5_135, %c0_136, %c0_137] : memref<8x2x32xf32, #tpu.memory_space<vmem>>, vector<1x2x32xf32>
    %285 = vector.shape_cast %284 : vector<1x2x32xf32> to vector<2x32xf32>
    %286 = vector.shape_cast %281 : vector<2x32xf32> to vector<1x2x32xf32>
    tpu.vector_store %arg4[%c5_135, %c0_136, %c0_137], %286 {strides = array<i32>} : memref<8x2x32xf32, #tpu.memory_space<vmem>>, vector<1x2x32xf32>,
    %c0_138 = arith.constant 0 : index
    %c0_139 = arith.constant 0 : index
    %287 = vector.load %arg5[%c0_138, %c0_139] : memref<2x32xf32, #tpu.memory_space<vmem>>, vector<2x32xf32>
    %c0_140 = arith.constant 0 : index
    %c0_141 = arith.constant 0 : index
    %288 = vector.load %arg6[%c0_140, %c0_141] : memref<2x32xf32, #tpu.memory_space<vmem>>, vector<2x32xf32>
    %c6 = arith.constant 6 : index
    %c0_142 = arith.constant 0 : index
    %c0_143 = arith.constant 0 : index
    %c0_144 = arith.constant 0 : index
    %289 = vector.load %arg2[%c6, %c0_142, %c0_143, %c0_144] : memref<8x4x2x32xf32, #tpu.memory_space<vmem>>, vector<1x4x2x32xf32>
    %290 = vector.shape_cast %289 : vector<1x4x2x32xf32> to vector<4x2x32xf32>
    %cst_145 = arith.constant dense<0.000000e+00> : vector<2x32xf32>
    %291 = tpu.matmul %287, %4, %cst_145 {dimension_numbers = #tpu.dot_dimension_numbers<[1], [0], [0], [1], [0, 0, 1, 1], [], []>} : vector<2x32xf32>, vector<32x32xf32>, vector<2x32xf32> -> vector<2x32xf32>
    %292 = vector.extract_strided_slice %290 {offsets = [0, 0, 0], sizes = [1, 2, 32], strides = [1, 1, 1]} : vector<4x2x32xf32> to vector<1x2x32xf32>
    %293 = vector.shape_cast %292 : vector<1x2x32xf32> to vector<2x32xf32>
    %294 = arith.addf %291, %293 : vector<2x32xf32>
    %295 = arith.negf %294 : vector<2x32xf32>
    %296 = math.exp %295 : vector<2x32xf32>
    %cst_146 = arith.constant 1.000000e+00 : f32
    %297 = vector.broadcast %cst_146 : f32 to vector<2x32xf32>
    %298 = arith.addf %297, %296 : vector<2x32xf32>
    %299 = arith.divf %297, %298 : vector<2x32xf32>
    %cst_147 = arith.constant dense<0.000000e+00> : vector<2x32xf32>
    %300 = tpu.matmul %287, %6, %cst_147 {dimension_numbers = #tpu.dot_dimension_numbers<[1], [0], [0], [1], [0, 0, 1, 1], [], []>} : vector<2x32xf32>, vector<32x32xf32>, vector<2x32xf32> -> vector<2x32xf32>
    %301 = vector.extract_strided_slice %290 {offsets = [1, 0, 0], sizes = [1, 2, 32], strides = [1, 1, 1]} : vector<4x2x32xf32> to vector<1x2x32xf32>
    %302 = vector.shape_cast %301 : vector<1x2x32xf32> to vector<2x32xf32>
    %303 = arith.addf %300, %302 : vector<2x32xf32>
    %304 = arith.negf %303 : vector<2x32xf32>
    %305 = math.exp %304 : vector<2x32xf32>
    %cst_148 = arith.constant 1.000000e+00 : f32
    %306 = vector.broadcast %cst_148 : f32 to vector<2x32xf32>
    %307 = arith.addf %306, %305 : vector<2x32xf32>
    %308 = arith.divf %306, %307 : vector<2x32xf32>
    %cst_149 = arith.constant dense<0.000000e+00> : vector<2x32xf32>
    %309 = tpu.matmul %287, %8, %cst_149 {dimension_numbers = #tpu.dot_dimension_numbers<[1], [0], [0], [1], [0, 0, 1, 1], [], []>} : vector<2x32xf32>, vector<32x32xf32>, vector<2x32xf32> -> vector<2x32xf32>
    %310 = vector.extract_strided_slice %290 {offsets = [2, 0, 0], sizes = [1, 2, 32], strides = [1, 1, 1]} : vector<4x2x32xf32> to vector<1x2x32xf32>
    %311 = vector.shape_cast %310 : vector<1x2x32xf32> to vector<2x32xf32>
    %312 = arith.addf %309, %311 : vector<2x32xf32>
    %313 = math.tanh %312 : vector<2x32xf32>
    %cst_150 = arith.constant dense<0.000000e+00> : vector<2x32xf32>
    %314 = tpu.matmul %287, %10, %cst_150 {dimension_numbers = #tpu.dot_dimension_numbers<[1], [0], [0], [1], [0, 0, 1, 1], [], []>} : vector<2x32xf32>, vector<32x32xf32>, vector<2x32xf32> -> vector<2x32xf32>
    %315 = vector.extract_strided_slice %290 {offsets = [3, 0, 0], sizes = [1, 2, 32], strides = [1, 1, 1]} : vector<4x2x32xf32> to vector<1x2x32xf32>
    %316 = vector.shape_cast %315 : vector<1x2x32xf32> to vector<2x32xf32>
    %317 = arith.addf %314, %316 : vector<2x32xf32>
    %318 = arith.negf %317 : vector<2x32xf32>
    %319 = math.exp %318 : vector<2x32xf32>
    %cst_151 = arith.constant 1.000000e+00 : f32
    %320 = vector.broadcast %cst_151 : f32 to vector<2x32xf32>
    %321 = arith.addf %320, %319 : vector<2x32xf32>
    %322 = arith.divf %320, %321 : vector<2x32xf32>
    %323 = arith.mulf %308, %288 : vector<2x32xf32>
    %324 = arith.mulf %299, %313 : vector<2x32xf32>
    %325 = arith.addf %323, %324 : vector<2x32xf32>
    %326 = math.tanh %325 : vector<2x32xf32>
    %327 = arith.mulf %322, %326 : vector<2x32xf32>
    %c0_152 = arith.constant 0 : index
    %c0_153 = arith.constant 0 : index
    %328 = vector.load %arg6[%c0_152, %c0_153] : memref<2x32xf32, #tpu.memory_space<vmem>>, vector<2x32xf32>
    tpu.vector_store %arg6[%c0_152, %c0_153], %325 {strides = array<i32>} : memref<2x32xf32, #tpu.memory_space<vmem>>, vector<2x32xf32>,
    %c0_154 = arith.constant 0 : index
    %c0_155 = arith.constant 0 : index
    %329 = vector.load %arg5[%c0_154, %c0_155] : memref<2x32xf32, #tpu.memory_space<vmem>>, vector<2x32xf32>
    tpu.vector_store %arg5[%c0_154, %c0_155], %327 {strides = array<i32>} : memref<2x32xf32, #tpu.memory_space<vmem>>, vector<2x32xf32>,
    %c6_156 = arith.constant 6 : index
    %c0_157 = arith.constant 0 : index
    %c0_158 = arith.constant 0 : index
    %330 = vector.load %arg4[%c6_156, %c0_157, %c0_158] : memref<8x2x32xf32, #tpu.memory_space<vmem>>, vector<1x2x32xf32>
    %331 = vector.shape_cast %330 : vector<1x2x32xf32> to vector<2x32xf32>
    %332 = vector.shape_cast %327 : vector<2x32xf32> to vector<1x2x32xf32>
    tpu.vector_store %arg4[%c6_156, %c0_157, %c0_158], %332 {strides = array<i32>} : memref<8x2x32xf32, #tpu.memory_space<vmem>>, vector<1x2x32xf32>,
    %c0_159 = arith.constant 0 : index
    %c0_160 = arith.constant 0 : index
    %333 = vector.load %arg5[%c0_159, %c0_160] : memref<2x32xf32, #tpu.memory_space<vmem>>, vector<2x32xf32>
    %c0_161 = arith.constant 0 : index
    %c0_162 = arith.constant 0 : index
    %334 = vector.load %arg6[%c0_161, %c0_162] : memref<2x32xf32, #tpu.memory_space<vmem>>, vector<2x32xf32>
    %c7 = arith.constant 7 : index
    %c0_163 = arith.constant 0 : index
    %c0_164 = arith.constant 0 : index
    %c0_165 = arith.constant 0 : index
    %335 = vector.load %arg2[%c7, %c0_163, %c0_164, %c0_165] : memref<8x4x2x32xf32, #tpu.memory_space<vmem>>, vector<1x4x2x32xf32>
    %336 = vector.shape_cast %335 : vector<1x4x2x32xf32> to vector<4x2x32xf32>
    %cst_166 = arith.constant dense<0.000000e+00> : vector<2x32xf32>
    %337 = tpu.matmul %333, %4, %cst_166 {dimension_numbers = #tpu.dot_dimension_numbers<[1], [0], [0], [1], [0, 0, 1, 1], [], []>} : vector<2x32xf32>, vector<32x32xf32>, vector<2x32xf32> -> vector<2x32xf32>
    %338 = vector.extract_strided_slice %336 {offsets = [0, 0, 0], sizes = [1, 2, 32], strides = [1, 1, 1]} : vector<4x2x32xf32> to vector<1x2x32xf32>
    %339 = vector.shape_cast %338 : vector<1x2x32xf32> to vector<2x32xf32>
    %340 = arith.addf %337, %339 : vector<2x32xf32>
    %341 = arith.negf %340 : vector<2x32xf32>
    %342 = math.exp %341 : vector<2x32xf32>
    %cst_167 = arith.constant 1.000000e+00 : f32
    %343 = vector.broadcast %cst_167 : f32 to vector<2x32xf32>
    %344 = arith.addf %343, %342 : vector<2x32xf32>
    %345 = arith.divf %343, %344 : vector<2x32xf32>
    %cst_168 = arith.constant dense<0.000000e+00> : vector<2x32xf32>
    %346 = tpu.matmul %333, %6, %cst_168 {dimension_numbers = #tpu.dot_dimension_numbers<[1], [0], [0], [1], [0, 0, 1, 1], [], []>} : vector<2x32xf32>, vector<32x32xf32>, vector<2x32xf32> -> vector<2x32xf32>
    %347 = vector.extract_strided_slice %336 {offsets = [1, 0, 0], sizes = [1, 2, 32], strides = [1, 1, 1]} : vector<4x2x32xf32> to vector<1x2x32xf32>
    %348 = vector.shape_cast %347 : vector<1x2x32xf32> to vector<2x32xf32>
    %349 = arith.addf %346, %348 : vector<2x32xf32>
    %350 = arith.negf %349 : vector<2x32xf32>
    %351 = math.exp %350 : vector<2x32xf32>
    %cst_169 = arith.constant 1.000000e+00 : f32
    %352 = vector.broadcast %cst_169 : f32 to vector<2x32xf32>
    %353 = arith.addf %352, %351 : vector<2x32xf32>
    %354 = arith.divf %352, %353 : vector<2x32xf32>
    %cst_170 = arith.constant dense<0.000000e+00> : vector<2x32xf32>
    %355 = tpu.matmul %333, %8, %cst_170 {dimension_numbers = #tpu.dot_dimension_numbers<[1], [0], [0], [1], [0, 0, 1, 1], [], []>} : vector<2x32xf32>, vector<32x32xf32>, vector<2x32xf32> -> vector<2x32xf32>
    %356 = vector.extract_strided_slice %336 {offsets = [2, 0, 0], sizes = [1, 2, 32], strides = [1, 1, 1]} : vector<4x2x32xf32> to vector<1x2x32xf32>
    %357 = vector.shape_cast %356 : vector<1x2x32xf32> to vector<2x32xf32>
    %358 = arith.addf %355, %357 : vector<2x32xf32>
    %359 = math.tanh %358 : vector<2x32xf32>
    %cst_171 = arith.constant dense<0.000000e+00> : vector<2x32xf32>
    %360 = tpu.matmul %333, %10, %cst_171 {dimension_numbers = #tpu.dot_dimension_numbers<[1], [0], [0], [1], [0, 0, 1, 1], [], []>} : vector<2x32xf32>, vector<32x32xf32>, vector<2x32xf32> -> vector<2x32xf32>
    %361 = vector.extract_strided_slice %336 {offsets = [3, 0, 0], sizes = [1, 2, 32], strides = [1, 1, 1]} : vector<4x2x32xf32> to vector<1x2x32xf32>
    %362 = vector.shape_cast %361 : vector<1x2x32xf32> to vector<2x32xf32>
    %363 = arith.addf %360, %362 : vector<2x32xf32>
    %364 = arith.negf %363 : vector<2x32xf32>
    %365 = math.exp %364 : vector<2x32xf32>
    %cst_172 = arith.constant 1.000000e+00 : f32
    %366 = vector.broadcast %cst_172 : f32 to vector<2x32xf32>
    %367 = arith.addf %366, %365 : vector<2x32xf32>
    %368 = arith.divf %366, %367 : vector<2x32xf32>
    %369 = arith.mulf %354, %334 : vector<2x32xf32>
    %370 = arith.mulf %345, %359 : vector<2x32xf32>
    %371 = arith.addf %369, %370 : vector<2x32xf32>
    %372 = math.tanh %371 : vector<2x32xf32>
    %373 = arith.mulf %368, %372 : vector<2x32xf32>
    %c0_173 = arith.constant 0 : index
    %c0_174 = arith.constant 0 : index
    %374 = vector.load %arg6[%c0_173, %c0_174] : memref<2x32xf32, #tpu.memory_space<vmem>>, vector<2x32xf32>
    tpu.vector_store %arg6[%c0_173, %c0_174], %371 {strides = array<i32>} : memref<2x32xf32, #tpu.memory_space<vmem>>, vector<2x32xf32>,
    %c0_175 = arith.constant 0 : index
    %c0_176 = arith.constant 0 : index
    %375 = vector.load %arg5[%c0_175, %c0_176] : memref<2x32xf32, #tpu.memory_space<vmem>>, vector<2x32xf32>
    tpu.vector_store %arg5[%c0_175, %c0_176], %373 {strides = array<i32>} : memref<2x32xf32, #tpu.memory_space<vmem>>, vector<2x32xf32>,
    %c7_177 = arith.constant 7 : index
    %c0_178 = arith.constant 0 : index
    %c0_179 = arith.constant 0 : index
    %376 = vector.load %arg4[%c7_177, %c0_178, %c0_179] : memref<8x2x32xf32, #tpu.memory_space<vmem>>, vector<1x2x32xf32>
    %377 = vector.shape_cast %376 : vector<1x2x32xf32> to vector<2x32xf32>
    %378 = vector.shape_cast %373 : vector<2x32xf32> to vector<1x2x32xf32>
    tpu.vector_store %arg4[%c7_177, %c0_178, %c0_179], %378 {strides = array<i32>} : memref<8x2x32xf32, #tpu.memory_space<vmem>>, vector<1x2x32xf32>,
    return
  }
  func.func @transform_0(%arg0: i32, %arg1: i32) -> (i32, i32, i32, i32) {
    %c0_i32 = arith.constant 0 : i32
    %c0_i32_0 = arith.constant 0 : i32
    %c0_i32_1 = arith.constant 0 : i32
    return %arg1, %c0_i32, %arg0, %c0_i32_0 : i32, i32, i32, i32
  }
  func.func @transform_1(%arg0: i32, %arg1: i32) -> (i32, i32, i32) {
    %c0_i32 = arith.constant 0 : i32
    %c0_i32_0 = arith.constant 0 : i32
    %c0_i32_1 = arith.constant 0 : i32
    %c0_i32_2 = arith.constant 0 : i32
    return %c0_i32, %c0_i32_0, %c0_i32_1 : i32, i32, i32
  }
  func.func @transform_2(%arg0: i32, %arg1: i32) -> (i32, i32, i32) {
    %c0_i32 = arith.constant 0 : i32
    %c0_i32_0 = arith.constant 0 : i32
    return %arg1, %arg0, %c0_i32 : i32, i32, i32
  }
}

</mosaic_0001>

<llo_original>
// kernel: tpu_custom_call.1
$region0: #{tpu_custom_call.1}
  #allocation0 [shape = 'u32[]', space=smem, size = 0x4, offset = 0x4, fixed_abs, tag = 'smem constant byte address 0x4 - core index']
  #allocation1 [shape = 'u32[72,128]{1,0:T(1,128)}', space=vmem, size = 0x9000, scoped, tag = 'internal scratch']
  #allocation2 [shape = 'f32[2,32]{1,0:T(2,128)}', space=vmem, size = 0x400, scoped, tag = 'scratch operand']
  #allocation3 [shape = 'f32[2,32]{1,0:T(2,128)}', space=vmem, size = 0x400, scoped, tag = 'scratch operand']
  %s0 = inlined_call_operand.hbm [shape: f32[8,4,2,32], index: 0, kind: input, shape index: {}]
  %s1 = inlined_call_operand.hbm [shape: f32[4,32,32], index: 1, kind: input, shape index: {}]
  %s2 = inlined_call_operand.hbm [shape: f32[8,2,32], index: 2, kind: output, shape index: {}]
  %s3 = sld [smem:[#allocation0]]
  $region30: #{tpu_custom_call.1} parent=0
    _
  %s5 = ssub.s32 1, %s3
  %s6 = scalar_select 0, %s5, %s3
  $region1: #{tpu_custom_call.1} parent=0
    #allocation4 [shape = 'u8[32768]{0}', space=vmem, size = 0x8000, scoped, tag = 'input window, operand 0, single buffered']
    #allocation5 [shape = 's32[1]{0}', space=sflag, size = 0x4, scoped, tag = 'scoped memory for tpu_custom_call.1']
    #allocation6 [shape = 's32[1]{0}', space=sflag, size = 0x4, scoped, tag = 'scoped memory for tpu_custom_call.1']
    #allocation7 [shape = 'u8[65536]{0}', space=vmem, size = 0x10000, scoped, tag = 'input window, operand 1, single buffered']
    #allocation8 [shape = 's32[1]{0}', space=sflag, size = 0x4, scoped, tag = 'scoped memory for tpu_custom_call.1']
    #allocation9 [shape = 'u8[8192]{0}', space=vmem, size = 0x2000, scoped, tag = 'output window, operand 0, single buffered']
    %7 = vsyncpa [#allocation5], 0
    %8 = vsyncpa [#allocation8], 0
    %9 = vsyncpa [#allocation6], 0
    // Predicated region
    $region2: #{tpu_custom_call.1} parent=1 // pred_check
      _
    $region3: #{tpu_custom_call.1} parent=1 // pred_check_branch
      %11 = sbr.rel (0) target = $region5
    $region4: #{tpu_custom_call.1} parent=1 // pred_region
      %13 = vsyncadd [#allocation5], 0
      %s14 = sshll.u32 %s0, 4
      %s15 = int_to_ptr.hbm [resolvable:$true] %s14
      %s16 = sshll.u32 [#allocation4], 4
      %s17 = int_to_ptr.vmem [resolvable:$true] %s16
      %22 = dma.hbm_to_vmem [thread:$0]  %s15, 1024, %s17, [#allocation5], 32, 32, 2
    $region5: #{tpu_custom_call.1} parent=1 // pred_fallthru
      _
    // Predicated region
    $region6: #{tpu_custom_call.1} parent=1 // pred_check
      _
    $region7: #{tpu_custom_call.1} parent=1 // pred_check_branch
      %24 = sbr.rel (0) target = $region9
    $region8: #{tpu_custom_call.1} parent=1 // pred_region
      %26 = vsyncadd [#allocation8], 0
      %s27 = sshll.u32 %s1, 4
      %s28 = int_to_ptr.hbm [resolvable:$true] %s27
      %s29 = sshll.u32 [#allocation7], 4
      %s30 = int_to_ptr.vmem [resolvable:$true] %s29
      %35 = dma.hbm_to_vmem [thread:$0]  %s28, 2048, %s30, [#allocation8], 128, 128, 8
    $region9: #{tpu_custom_call.1} parent=1 // pred_fallthru
      _
    // Predicated region
    $region10: #{tpu_custom_call.1} parent=1 // pred_check
      _
    $region11: #{tpu_custom_call.1} parent=1 // pred_check_branch
      %37 = sbr.rel (0) target = $region13
    $region12: #{tpu_custom_call.1} parent=1 // pred_region
      %39 = dma.done [#allocation5], 1024
    $region13: #{tpu_custom_call.1} parent=1 // pred_fallthru
      _
    // Predicated region
    $region14: #{tpu_custom_call.1} parent=1 // pred_check
      _
    $region15: #{tpu_custom_call.1} parent=1 // pred_check_branch
      %41 = sbr.rel (0) target = $region17
    $region16: #{tpu_custom_call.1} parent=1 // pred_region
      %43 = dma.done [#allocation8], 2048
    $region17: #{tpu_custom_call.1} parent=1 // pred_fallthru
      _
    %p44 = scmp.eq.s32.totalorder 0, 0
    // Predicated region
    $region18: #{tpu_custom_call.1} parent=1 // pred_check
      %p45 = pneg %p44
    $region19: #{tpu_custom_call.1} parent=1 // pred_check_branch
      %47 = sbr.rel (%p45) target = $region21
    $region20: #{tpu_custom_call.1} parent=1 // pred_region
      %vm48 = vcmask 254976
      %49 = vst.msk [vmem:[#allocation2] sm:$0x3] %vm48, 0.0
      %50 = vst.msk [vmem:[#allocation3] sm:$0x3] %vm48, 0.0
    $region21: #{tpu_custom_call.1} parent=1 // pred_fallthru
      _
    %v51 = vld [vmem:[#allocation7] sm:$0xff]
    %v52 = vld [vmem:[#allocation7 + $0x8] sm:$0xff]
    %v53 = vld [vmem:[#allocation7 + $0x10] sm:$0xff]
    %v54 = vld [vmem:[#allocation7 + $0x18] sm:$0xff]
    %s55 = scalar_lea.vmem [#allocation7], 32
    %v56 = vld [vmem:[%s55] sm:$0xff]
    %v57 = vld [vmem:[%s55 + $0x8] sm:$0xff]
    %v58 = vld [vmem:[%s55 + $0x10] sm:$0xff]
    %v59 = vld [vmem:[%s55 + $0x18] sm:$0xff]
    %s60 = scalar_lea.vmem [#allocation7], 64
    %v61 = vld [vmem:[%s60] sm:$0xff]
    %v62 = vld [vmem:[%s60 + $0x8] sm:$0xff]
    %v63 = vld [vmem:[%s60 + $0x10] sm:$0xff]
    %v64 = vld [vmem:[%s60 + $0x18] sm:$0xff]
    %s65 = scalar_lea.vmem [#allocation7], 96
    %v66 = vld [vmem:[%s65] sm:$0xff]
    %v67 = vld [vmem:[%s65 + $0x8] sm:$0xff]
    %v68 = vld [vmem:[%s65 + $0x10] sm:$0xff]
    %v69 = vld [vmem:[%s65 + $0x18] sm:$0xff]
    %v70 = vld [vmem:[#allocation2] sm:$0x3]
    %v71 = vld [vmem:[#allocation3] sm:$0x3]
    %v72 = vld [vmem:[#allocation4] sm:$0x3]
    %v73 = vld [vmem:[#allocation4 + $0x2] sm:$0x3]
    %v74 = vld [vmem:[#allocation4 + $0x4] sm:$0x3]
    %v75 = vld [vmem:[#allocation4 + $0x6] sm:$0x3]
    %vm76 = vcmask 261120
    %v78 = vsel %vm76, %v70, 0
    %80 = vmatpush.msra.mxu0 0.0
    %81 = vmatpush.msra.mxu0 0.0
    %82 = vmatpush.msra.mxu0 0.0
    %83 = vmatpush.msra.mxu0 0.0
    %84 = vmatpush.msra.mxu0 0.0
    %85 = vmatpush.msra.mxu0 0.0
    %86 = vmatpush.msra.mxu0 0.0
    %87 = vmatpush.msra.mxu0 0.0
    %88 = vmatpush.msra.mxu0 0.0
    %89 = vmatpush.msra.mxu0 0.0
    %90 = vmatpush.msra.mxu0 0.0
    %91 = vmatpush.msra.mxu0 0.0
    %92 = vmatpush.msra.mxu0 %v54
    %93 = vmatpush.msra.mxu0 %v53
    %94 = vmatpush.msra.mxu0 %v52
    %95 = vmatpush.msra.mxu0 %v51
    %96 = vmatmul.f32.gmra.mxu0 %v78
    %v97 = vpop.f32.mrf.mxu0
    %v98 = vadd.f32 %v72, %v97
    %99 = vdwg.mxu0
    %v100 = vxor.u32 %v98, 2147483648
    %v101 = vmul.f32 %v100, 1.442695
    %v102 = vpow.pop %v101
    %v103 = vadd.f32 %v102, 1.0
    %v104 = vrcp.pop %v103
    %v105 = vmul.f32 %v103, %v104
    %v106 = vsub.f32 1.0, %v105
    %v107 = vmul.f32 %v104, %v106
    %v108 = vadd.f32 %v104, %v107
    %vm109 = vweird.f32 %v103
    %vm110 = vweird.f32 %v104
    %vm111 = vmor %vm109, %vm110
    %v112 = vsel %vm111, %v104, %v108
    %v113 = vand.u32 2147483647, %v103
    %vm114 = vcmp.eq.f32.partialorder %v113, 8.507059e+37
    %v115 = vand.u32 %v103, 2147483648
    %v116 = vor.u32 1.1754944e-38, %v115
    %v117 = vsel %vm114, %v116, %v112
    %v118 = vmul.f32 1.0, %v117
    %119 = vmatpush.msra.mxu0 0.0
    %120 = vmatpush.msra.mxu0 0.0
    %121 = vmatpush.msra.mxu0 0.0
    %122 = vmatpush.msra.mxu0 0.0
    %123 = vmatpush.msra.mxu0 0.0
    %124 = vmatpush.msra.mxu0 0.0
    %125 = vmatpush.msra.mxu0 0.0
    %126 = vmatpush.msra.mxu0 0.0
    %127 = vmatpush.msra.mxu0 0.0
    %128 = vmatpush.msra.mxu0 0.0
    %129 = vmatpush.msra.mxu0 0.0
    %130 = vmatpush.msra.mxu0 0.0
    %131 = vmatpush.msra.mxu0 %v59
    %132 = vmatpush.msra.mxu0 %v58
    %133 = vmatpush.msra.mxu0 %v57
    %134 = vmatpush.msra.mxu0 %v56
    %135 = vmatmul.f32.gmra.mxu0 %v78
    %v136 = vpop.f32.mrf.mxu0
    %v137 = vadd.f32 %v73, %v136
    %138 = vdwg.mxu0
    %v139 = vxor.u32 %v137, 2147483648
    %v140 = vmul.f32 %v139, 1.442695
    %v141 = vpow.pop %v140
    %v142 = vadd.f32 %v141, 1.0
    %v143 = vrcp.pop %v142
    %v144 = vmul.f32 %v142, %v143
    %v145 = vsub.f32 1.0, %v144
    %v146 = vmul.f32 %v143, %v145
    %v147 = vadd.f32 %v143, %v146
    %vm148 = vweird.f32 %v142
    %vm149 = vweird.f32 %v143
    %vm150 = vmor %vm148, %vm149
    %v151 = vsel %vm150, %v143, %v147
    %v152 = vand.u32 2147483647, %v142
    %vm153 = vcmp.eq.f32.partialorder %v152, 8.507059e+37
    %v154 = vand.u32 %v142, 2147483648
    %v155 = vor.u32 1.1754944e-38, %v154
    %v156 = vsel %vm153, %v155, %v151
    %v157 = vmul.f32 1.0, %v156
    %158 = vmatpush.msra.mxu0 0.0
    %159 = vmatpush.msra.mxu0 0.0
    %160 = vmatpush.msra.mxu0 0.0
    %161 = vmatpush.msra.mxu0 0.0
    %162 = vmatpush.msra.mxu0 0.0
    %163 = vmatpush.msra.mxu0 0.0
    %164 = vmatpush.msra.mxu0 0.0
    %165 = vmatpush.msra.mxu0 0.0
    %166 = vmatpush.msra.mxu0 0.0
    %167 = vmatpush.msra.mxu0 0.0
    %168 = vmatpush.msra.mxu0 0.0
    %169 = vmatpush.msra.mxu0 0.0
    %170 = vmatpush.msra.mxu0 %v64
    %171 = vmatpush.msra.mxu0 %v63
    %172 = vmatpush.msra.mxu0 %v62
    %173 = vmatpush.msra.mxu0 %v61
    %174 = vmatmul.f32.gmra.mxu0 %v78
    %v175 = vpop.f32.mrf.mxu0
    %v176 = vadd.f32 %v74, %v175
    %177 = vdwg.mxu0
    %v178 = vtanh.pop %v176
    %179 = vmatpush.msra.mxu0 0.0
    %180 = vmatpush.msra.mxu0 0.0
    %181 = vmatpush.msra.mxu0 0.0
    %182 = vmatpush.msra.mxu0 0.0
    %183 = vmatpush.msra.mxu0 0.0
    %184 = vmatpush.msra.mxu0 0.0
    %185 = vmatpush.msra.mxu0 0.0
    %186 = vmatpush.msra.mxu0 0.0
    %187 = vmatpush.msra.mxu0 0.0
    %188 = vmatpush.msra.mxu0 0.0
    %189 = vmatpush.msra.mxu0 0.0
    %190 = vmatpush.msra.mxu0 0.0
    %191 = vmatpush.msra.mxu0 %v69
    %192 = vmatpush.msra.mxu0 %v68
    %193 = vmatpush.msra.mxu0 %v67
    %194 = vmatpush.msra.mxu0 %v66
    %195 = vmatmul.f32.gmra.mxu0 %v78
    %v196 = vpop.f32.mrf.mxu0
    %v197 = vadd.f32 %v75, %v196
    %198 = vdwg.mxu0
    %v199 = vxor.u32 %v197, 2147483648
    %v200 = vmul.f32 %v199, 1.442695
    %v201 = vpow.pop %v200
    %v202 = vadd.f32 %v201, 1.0
    %v203 = vrcp.pop %v202
    %v204 = vmul.f32 %v202, %v203
    %v205 = vsub.f32 1.0, %v204
    %v206 = vmul.f32 %v203, %v205
    %v207 = vadd.f32 %v203, %v206
    %vm208 = vweird.f32 %v202
    %vm209 = vweird.f32 %v203
    %vm210 = vmor %vm208, %vm209
    %v211 = vsel %vm210, %v203, %v207
    %v212 = vand.u32 2147483647, %v202
    %vm213 = vcmp.eq.f32.partialorder %v212, 8.507059e+37
    %v214 = vand.u32 %v202, 2147483648
    %v215 = vor.u32 1.1754944e-38, %v214
    %v216 = vsel %vm213, %v215, %v211
    %v217 = vmul.f32 1.0, %v216
    %v218 = vmul.f32 %v157, %v71
    %v219 = vmul.f32 %v118, %v178
    %v220 = vadd.f32 %v218, %v219
    %v221 = vtanh.pop %v220
    %v222 = vmul.f32 %v217, %v221
    %vm223 = vcmask 254976
    %224 = vst.msk [vmem:[#allocation3] sm:$0x3] %vm223, %v220
    %225 = vst.msk [vmem:[#allocation2] sm:$0x3] %vm223, %v222
    %226 = vst.msk [vmem:[#allocation9] sm:$0x3] %vm223, %v222
    %v227 = vld [vmem:[#allocation2] sm:$0x3]
    %v228 = vld [vmem:[#allocation3] sm:$0x3]
    %s229 = scalar_lea.vmem [#allocation4], 8
    %v230 = vld [vmem:[%s229] sm:$0x3]
    %v231 = vld [vmem:[%s229 + $0x2] sm:$0x3]
    %v232 = vld [vmem:[%s229 + $0x4] sm:$0x3]
    %v233 = vld [vmem:[%s229 + $0x6] sm:$0x3]
    %v235 = vsel %vm76, %v227, 0
    %237 = vmatpush.msra.mxu0 0.0
    %238 = vmatpush.msra.mxu0 0.0
    %239 = vmatpush.msra.mxu0 0.0
    %240 = vmatpush.msra.mxu0 0.0
    %241 = vmatpush.msra.mxu0 0.0
    %242 = vmatpush.msra.mxu0 0.0
    %243 = vmatpush.msra.mxu0 0.0
    %244 = vmatpush.msra.mxu0 0.0
    %245 = vmatpush.msra.mxu0 0.0
    %246 = vmatpush.msra.mxu0 0.0
    %247 = vmatpush.msra.mxu0 0.0
    %248 = vmatpush.msra.mxu0 0.0
    %249 = vmatpush.msra.mxu0 %v54
    %250 = vmatpush.msra.mxu0 %v53
    %251 = vmatpush.msra.mxu0 %v52
    %252 = vmatpush.msra.mxu0 %v51
    %253 = vmatmul.f32.gmra.mxu0 %v235
    %v254 = vpop.f32.mrf.mxu0
    %v255 = vadd.f32 %v230, %v254
    %256 = vdwg.mxu0
    %v257 = vxor.u32 %v255, 2147483648
    %v258 = vmul.f32 %v257, 1.442695
    %v259 = vpow.pop %v258
    %v260 = vadd.f32 %v259, 1.0
    %v261 = vrcp.pop %v260
    %v262 = vmul.f32 %v260, %v261
    %v263 = vsub.f32 1.0, %v262
    %v264 = vmul.f32 %v261, %v263
    %v265 = vadd.f32 %v261, %v264
    %vm266 = vweird.f32 %v260
    %vm267 = vweird.f32 %v261
    %vm268 = vmor %vm266, %vm267
    %v269 = vsel %vm268, %v261, %v265
    %v270 = vand.u32 2147483647, %v260
    %vm271 = vcmp.eq.f32.partialorder %v270, 8.507059e+37
    %v272 = vand.u32 %v260, 2147483648
    %v273 = vor.u32 1.1754944e-38, %v272
    %v274 = vsel %vm271, %v273, %v269
    %v275 = vmul.f32 1.0, %v274
    %276 = vmatpush.msra.mxu0 0.0
    %277 = vmatpush.msra.mxu0 0.0
    %278 = vmatpush.msra.mxu0 0.0
    %279 = vmatpush.msra.mxu0 0.0
    %280 = vmatpush.msra.mxu0 0.0
    %281 = vmatpush.msra.mxu0 0.0
    %282 = vmatpush.msra.mxu0 0.0
    %283 = vmatpush.msra.mxu0 0.0
    %284 = vmatpush.msra.mxu0 0.0
    %285 = vmatpush.msra.mxu0 0.0
    %286 = vmatpush.msra.mxu0 0.0
    %287 = vmatpush.msra.mxu0 0.0
    %288 = vmatpush.msra.mxu0 %v59
    %289 = vmatpush.msra.mxu0 %v58
    %290 = vmatpush.msra.mxu0 %v57
    %291 = vmatpush.msra.mxu0 %v56
    %292 = vmatmul.f32.gmra.mxu0 %v235
    %v293 = vpop.f32.mrf.mxu0
    %v294 = vadd.f32 %v231, %v293
    %295 = vdwg.mxu0
    %v296 = vxor.u32 %v294, 2147483648
    %v297 = vmul.f32 %v296, 1.442695
    %v298 = vpow.pop %v297
    %v299 = vadd.f32 %v298, 1.0
    %v300 = vrcp.pop %v299
    %v301 = vmul.f32 %v299, %v300
    %v302 = vsub.f32 1.0, %v301
    %v303 = vmul.f32 %v300, %v302
    %v304 = vadd.f32 %v300, %v303
    %vm305 = vweird.f32 %v299
    %vm306 = vweird.f32 %v300
    %vm307 = vmor %vm305, %vm306
    %v308 = vsel %vm307, %v300, %v304
    %v309 = vand.u32 2147483647, %v299
    %vm310 = vcmp.eq.f32.partialorder %v309, 8.507059e+37
    %v311 = vand.u32 %v299, 2147483648
    %v312 = vor.u32 1.1754944e-38, %v311
    %v313 = vsel %vm310, %v312, %v308
    %v314 = vmul.f32 1.0, %v313
    %315 = vmatpush.msra.mxu0 0.0
    %316 = vmatpush.msra.mxu0 0.0
    %317 = vmatpush.msra.mxu0 0.0
    %318 = vmatpush.msra.mxu0 0.0
    %319 = vmatpush.msra.mxu0 0.0
    %320 = vmatpush.msra.mxu0 0.0
    %321 = vmatpush.msra.mxu0 0.0
    %322 = vmatpush.msra.mxu0 0.0
    %323 = vmatpush.msra.mxu0 0.0
    %324 = vmatpush.msra.mxu0 0.0
    %325 = vmatpush.msra.mxu0 0.0
    %326 = vmatpush.msra.mxu0 0.0
    %327 = vmatpush.msra.mxu0 %v64
    %328 = vmatpush.msra.mxu0 %v63
    %329 = vmatpush.msra.mxu0 %v62
    %330 = vmatpush.msra.mxu0 %v61
    %331 = vmatmul.f32.gmra.mxu0 %v235
    %v332 = vpop.f32.mrf.mxu0
    %v333 = vadd.f32 %v232, %v332
    %334 = vdwg.mxu0
    %v335 = vtanh.pop %v333
    %336 = vmatpush.msra.mxu0 0.0
    %337 = vmatpush.msra.mxu0 0.0
    %338 = vmatpush.msra.mxu0 0.0
    %339 = vmatpush.msra.mxu0 0.0
    %340 = vmatpush.msra.mxu0 0.0
    %341 = vmatpush.msra.mxu0 0.0
    %342 = vmatpush.msra.mxu0 0.0
    %343 = vmatpush.msra.mxu0 0.0
    %344 = vmatpush.msra.mxu0 0.0
    %345 = vmatpush.msra.mxu0 0.0
    %346 = vmatpush.msra.mxu0 0.0
    %347 = vmatpush.msra.mxu0 0.0
    %348 = vmatpush.msra.mxu0 %v69
    %349 = vmatpush.msra.mxu0 %v68
    %350 = vmatpush.msra.mxu0 %v67
    %351 = vmatpush.msra.mxu0 %v66
    %352 = vmatmul.f32.gmra.mxu0 %v235
    %v353 = vpop.f32.mrf.mxu0
    %v354 = vadd.f32 %v233, %v353
    %355 = vdwg.mxu0
    %v356 = vxor.u32 %v354, 2147483648
    %v357 = vmul.f32 %v356, 1.442695
    %v358 = vpow.pop %v357
    %v359 = vadd.f32 %v358, 1.0
    %v360 = vrcp.pop %v359
    %v361 = vmul.f32 %v359, %v360
    %v362 = vsub.f32 1.0, %v361
    %v363 = vmul.f32 %v360, %v362
    %v364 = vadd.f32 %v360, %v363
    %vm365 = vweird.f32 %v359
    %vm366 = vweird.f32 %v360
    %vm367 = vmor %vm365, %vm366
    %v368 = vsel %vm367, %v360, %v364
    %v369 = vand.u32 2147483647, %v359
    %vm370 = vcmp.eq.f32.partialorder %v369, 8.507059e+37
    %v371 = vand.u32 %v359, 2147483648
    %v372 = vor.u32 1.1754944e-38, %v371
    %v373 = vsel %vm370, %v372, %v368
    %v374 = vmul.f32 1.0, %v373
    %v375 = vmul.f32 %v314, %v228
    %v376 = vmul.f32 %v275, %v335
    %v377 = vadd.f32 %v375, %v376
    %v378 = vtanh.pop %v377
    %v379 = vmul.f32 %v374, %v378
    %380 = vst.msk [vmem:[#allocation3] sm:$0x3] %vm223, %v377
    %381 = vst.msk [vmem:[#allocation2] sm:$0x3] %vm223, %v379
    %s382 = scalar_lea.vmem [#allocation9], 2
    %383 = vst.msk [vmem:[%s382] sm:$0x3] %vm223, %v379
    %v384 = vld [vmem:[#allocation2] sm:$0x3]
    %v385 = vld [vmem:[#allocation3] sm:$0x3]
    %s386 = scalar_lea.vmem [#allocation4], 16
    %v387 = vld [vmem:[%s386] sm:$0x3]
    %v388 = vld [vmem:[%s386 + $0x2] sm:$0x3]
    %v389 = vld [vmem:[%s386 + $0x4] sm:$0x3]
    %v390 = vld [vmem:[%s386 + $0x6] sm:$0x3]
    %v392 = vsel %vm76, %v384, 0
    %394 = vmatpush.msra.mxu0 0.0
    %395 = vmatpush.msra.mxu0 0.0
    %396 = vmatpush.msra.mxu0 0.0
    %397 = vmatpush.msra.mxu0 0.0
    %398 = vmatpush.msra.mxu0 0.0
    %399 = vmatpush.msra.mxu0 0.0
    %400 = vmatpush.msra.mxu0 0.0
    %401 = vmatpush.msra.mxu0 0.0
    %402 = vmatpush.msra.mxu0 0.0
    %403 = vmatpush.msra.mxu0 0.0
    %404 = vmatpush.msra.mxu0 0.0
    %405 = vmatpush.msra.mxu0 0.0
    %406 = vmatpush.msra.mxu0 %v54
    %407 = vmatpush.msra.mxu0 %v53
    %408 = vmatpush.msra.mxu0 %v52
    %409 = vmatpush.msra.mxu0 %v51
    %410 = vmatmul.f32.gmra.mxu0 %v392
    %v411 = vpop.f32.mrf.mxu0
    %v412 = vadd.f32 %v387, %v411
    %413 = vdwg.mxu0
    %v414 = vxor.u32 %v412, 2147483648
    %v415 = vmul.f32 %v414, 1.442695
    %v416 = vpow.pop %v415
    %v417 = vadd.f32 %v416, 1.0
    %v418 = vrcp.pop %v417
    %v419 = vmul.f32 %v417, %v418
    %v420 = vsub.f32 1.0, %v419
    %v421 = vmul.f32 %v418, %v420
    %v422 = vadd.f32 %v418, %v421
    %vm423 = vweird.f32 %v417
    %vm424 = vweird.f32 %v418
    %vm425 = vmor %vm423, %vm424
    %v426 = vsel %vm425, %v418, %v422
    %v427 = vand.u32 2147483647, %v417
    %vm428 = vcmp.eq.f32.partialorder %v427, 8.507059e+37
    %v429 = vand.u32 %v417, 2147483648
    %v430 = vor.u32 1.1754944e-38, %v429
    %v431 = vsel %vm428, %v430, %v426
    %v432 = vmul.f32 1.0, %v431
    %433 = vmatpush.msra.mxu0 0.0
    %434 = vmatpush.msra.mxu0 0.0
    %435 = vmatpush.msra.mxu0 0.0
    %436 = vmatpush.msra.mxu0 0.0
    %437 = vmatpush.msra.mxu0 0.0
    %438 = vmatpush.msra.mxu0 0.0
    %439 = vmatpush.msra.mxu0 0.0
    %440 = vmatpush.msra.mxu0 0.0
    %441 = vmatpush.msra.mxu0 0.0
    %442 = vmatpush.msra.mxu0 0.0
    %443 = vmatpush.msra.mxu0 0.0
    %444 = vmatpush.msra.mxu0 0.0
    %445 = vmatpush.msra.mxu0 %v59
    %446 = vmatpush.msra.mxu0 %v58
    %447 = vmatpush.msra.mxu0 %v57
    %448 = vmatpush.msra.mxu0 %v56
    %449 = vmatmul.f32.gmra.mxu0 %v392
    %v450 = vpop.f32.mrf.mxu0
    %v451 = vadd.f32 %v388, %v450
    %452 = vdwg.mxu0
    %v453 = vxor.u32 %v451, 2147483648
    %v454 = vmul.f32 %v453, 1.442695
    %v455 = vpow.pop %v454
    %v456 = vadd.f32 %v455, 1.0
    %v457 = vrcp.pop %v456
    %v458 = vmul.f32 %v456, %v457
    %v459 = vsub.f32 1.0, %v458
    %v460 = vmul.f32 %v457, %v459
    %v461 = vadd.f32 %v457, %v460
    %vm462 = vweird.f32 %v456
    %vm463 = vweird.f32 %v457
    %vm464 = vmor %vm462, %vm463
    %v465 = vsel %vm464, %v457, %v461
    %v466 = vand.u32 2147483647, %v456
    %vm467 = vcmp.eq.f32.partialorder %v466, 8.507059e+37
    %v468 = vand.u32 %v456, 2147483648
    %v469 = vor.u32 1.1754944e-38, %v468
    %v470 = vsel %vm467, %v469, %v465
    %v471 = vmul.f32 1.0, %v470
    %472 = vmatpush.msra.mxu0 0.0
    %473 = vmatpush.msra.mxu0 0.0
    %474 = vmatpush.msra.mxu0 0.0
    %475 = vmatpush.msra.mxu0 0.0
    %476 = vmatpush.msra.mxu0 0.0
    %477 = vmatpush.msra.mxu0 0.0
    %478 = vmatpush.msra.mxu0 0.0
    %479 = vmatpush.msra.mxu0 0.0
    %480 = vmatpush.msra.mxu0 0.0
    %481 = vmatpush.msra.mxu0 0.0
    %482 = vmatpush.msra.mxu0 0.0
    %483 = vmatpush.msra.mxu0 0.0
    %484 = vmatpush.msra.mxu0 %v64
    %485 = vmatpush.msra.mxu0 %v63
    %486 = vmatpush.msra.mxu0 %v62
    %487 = vmatpush.msra.mxu0 %v61
    %488 = vmatmul.f32.gmra.mxu0 %v392
    %v489 = vpop.f32.mrf.mxu0
    %v490 = vadd.f32 %v389, %v489
    %491 = vdwg.mxu0
    %v492 = vtanh.pop %v490
    %493 = vmatpush.msra.mxu0 0.0
    %494 = vmatpush.msra.mxu0 0.0
    %495 = vmatpush.msra.mxu0 0.0
    %496 = vmatpush.msra.mxu0 0.0
    %497 = vmatpush.msra.mxu0 0.0
    %498 = vmatpush.msra.mxu0 0.0
    %499 = vmatpush.msra.mxu0 0.0
    %500 = vmatpush.msra.mxu0 0.0
    %501 = vmatpush.msra.mxu0 0.0
    %502 = vmatpush.msra.mxu0 0.0
    %503 = vmatpush.msra.mxu0 0.0
    %504 = vmatpush.msra.mxu0 0.0
    %505 = vmatpush.msra.mxu0 %v69
    %506 = vmatpush.msra.mxu0 %v68
    %507 = vmatpush.msra.mxu0 %v67
    %508 = vmatpush.msra.mxu0 %v66
    %509 = vmatmul.f32.gmra.mxu0 %v392
    %v510 = vpop.f32.mrf.mxu0
    %v511 = vadd.f32 %v390, %v510
    %512 = vdwg.mxu0
    %v513 = vxor.u32 %v511, 2147483648
    %v514 = vmul.f32 %v513, 1.442695
    %v515 = vpow.pop %v514
    %v516 = vadd.f32 %v515, 1.0
    %v517 = vrcp.pop %v516
    %v518 = vmul.f32 %v516, %v517
    %v519 = vsub.f32 1.0, %v518
    %v520 = vmul.f32 %v517, %v519
    %v521 = vadd.f32 %v517, %v520
    %vm522 = vweird.f32 %v516
    %vm523 = vweird.f32 %v517
    %vm524 = vmor %vm522, %vm523
    %v525 = vsel %vm524, %v517, %v521
    %v526 = vand.u32 2147483647, %v516
    %vm527 = vcmp.eq.f32.partialorder %v526, 8.507059e+37
    %v528 = vand.u32 %v516, 2147483648
    %v529 = vor.u32 1.1754944e-38, %v528
    %v530 = vsel %vm527, %v529, %v525
    %v531 = vmul.f32 1.0, %v530
    %v532 = vmul.f32 %v471, %v385
    %v533 = vmul.f32 %v432, %v492
    %v534 = vadd.f32 %v532, %v533
    %v535 = vtanh.pop %v534
    %v536 = vmul.f32 %v531, %v535
    %537 = vst.msk [vmem:[#allocation3] sm:$0x3] %vm223, %v534
    %538 = vst.msk [vmem:[#allocation2] sm:$0x3] %vm223, %v536
    %s539 = scalar_lea.vmem [#allocation9], 4
    %540 = vst.msk [vmem:[%s539] sm:$0x3] %vm223, %v536
    %v541 = vld [vmem:[#allocation2] sm:$0x3]
    %v542 = vld [vmem:[#allocation3] sm:$0x3]
    %s543 = scalar_lea.vmem [#allocation4], 24
    %v544 = vld [vmem:[%s543] sm:$0x3]
    %v545 = vld [vmem:[%s543 + $0x2] sm:$0x3]
    %v546 = vld [vmem:[%s543 + $0x4] sm:$0x3]
    %v547 = vld [vmem:[%s543 + $0x6] sm:$0x3]
    %v549 = vsel %vm76, %v541, 0
    %551 = vmatpush.msra.mxu0 0.0
    %552 = vmatpush.msra.mxu0 0.0
    %553 = vmatpush.msra.mxu0 0.0
    %554 = vmatpush.msra.mxu0 0.0
    %555 = vmatpush.msra.mxu0 0.0
    %556 = vmatpush.msra.mxu0 0.0
    %557 = vmatpush.msra.mxu0 0.0
    %558 = vmatpush.msra.mxu0 0.0
    %559 = vmatpush.msra.mxu0 0.0
    %560 = vmatpush.msra.mxu0 0.0
    %561 = vmatpush.msra.mxu0 0.0
    %562 = vmatpush.msra.mxu0 0.0
    %563 = vmatpush.msra.mxu0 %v54
    %564 = vmatpush.msra.mxu0 %v53
    %565 = vmatpush.msra.mxu0 %v52
    %566 = vmatpush.msra.mxu0 %v51
    %567 = vmatmul.f32.gmra.mxu0 %v549
    %v568 = vpop.f32.mrf.mxu0
    %v569 = vadd.f32 %v544, %v568
    %570 = vdwg.mxu0
    %v571 = vxor.u32 %v569, 2147483648
    %v572 = vmul.f32 %v571, 1.442695
    %v573 = vpow.pop %v572
    %v574 = vadd.f32 %v573, 1.0
    %v575 = vrcp.pop %v574
    %v576 = vmul.f32 %v574, %v575
    %v577 = vsub.f32 1.0, %v576
    %v578 = vmul.f32 %v575, %v577
    %v579 = vadd.f32 %v575, %v578
    %vm580 = vweird.f32 %v574
    %vm581 = vweird.f32 %v575
    %vm582 = vmor %vm580, %vm581
    %v583 = vsel %vm582, %v575, %v579
    %v584 = vand.u32 2147483647, %v574
    %vm585 = vcmp.eq.f32.partialorder %v584, 8.507059e+37
    %v586 = vand.u32 %v574, 2147483648
    %v587 = vor.u32 1.1754944e-38, %v586
    %v588 = vsel %vm585, %v587, %v583
    %v589 = vmul.f32 1.0, %v588
    %590 = vmatpush.msra.mxu0 0.0
    %591 = vmatpush.msra.mxu0 0.0
    %592 = vmatpush.msra.mxu0 0.0
    %593 = vmatpush.msra.mxu0 0.0
    %594 = vmatpush.msra.mxu0 0.0
    %595 = vmatpush.msra.mxu0 0.0
    %596 = vmatpush.msra.mxu0 0.0
    %597 = vmatpush.msra.mxu0 0.0
    %598 = vmatpush.msra.mxu0 0.0
    %599 = vmatpush.msra.mxu0 0.0
    %600 = vmatpush.msra.mxu0 0.0
    %601 = vmatpush.msra.mxu0 0.0
    %602 = vmatpush.msra.mxu0 %v59
    %603 = vmatpush.msra.mxu0 %v58
    %604 = vmatpush.msra.mxu0 %v57
    %605 = vmatpush.msra.mxu0 %v56
    %606 = vmatmul.f32.gmra.mxu0 %v549
    %v607 = vpop.f32.mrf.mxu0
    %v608 = vadd.f32 %v545, %v607
    %609 = vdwg.mxu0
    %v610 = vxor.u32 %v608, 2147483648
    %v611 = vmul.f32 %v610, 1.442695
    %v612 = vpow.pop %v611
    %v613 = vadd.f32 %v612, 1.0
    %v614 = vrcp.pop %v613
    %v615 = vmul.f32 %v613, %v614
    %v616 = vsub.f32 1.0, %v615
    %v617 = vmul.f32 %v614, %v616
    %v618 = vadd.f32 %v614, %v617
    %vm619 = vweird.f32 %v613
    %vm620 = vweird.f32 %v614
    %vm621 = vmor %vm619, %vm620
    %v622 = vsel %vm621, %v614, %v618
    %v623 = vand.u32 2147483647, %v613
    %vm624 = vcmp.eq.f32.partialorder %v623, 8.507059e+37
    %v625 = vand.u32 %v613, 2147483648
    %v626 = vor.u32 1.1754944e-38, %v625
    %v627 = vsel %vm624, %v626, %v622
    %v628 = vmul.f32 1.0, %v627
    %629 = vmatpush.msra.mxu0 0.0
    %630 = vmatpush.msra.mxu0 0.0
    %631 = vmatpush.msra.mxu0 0.0
    %632 = vmatpush.msra.mxu0 0.0
    %633 = vmatpush.msra.mxu0 0.0
    %634 = vmatpush.msra.mxu0 0.0
    %635 = vmatpush.msra.mxu0 0.0
    %636 = vmatpush.msra.mxu0 0.0
    %637 = vmatpush.msra.mxu0 0.0
    %638 = vmatpush.msra.mxu0 0.0
    %639 = vmatpush.msra.mxu0 0.0
    %640 = vmatpush.msra.mxu0 0.0
    %641 = vmatpush.msra.mxu0 %v64
    %642 = vmatpush.msra.mxu0 %v63
    %643 = vmatpush.msra.mxu0 %v62
    %644 = vmatpush.msra.mxu0 %v61
    %645 = vmatmul.f32.gmra.mxu0 %v549
    %v646 = vpop.f32.mrf.mxu0
    %v647 = vadd.f32 %v546, %v646
    %648 = vdwg.mxu0
    %v649 = vtanh.pop %v647
    %650 = vmatpush.msra.mxu0 0.0
    %651 = vmatpush.msra.mxu0 0.0
    %652 = vmatpush.msra.mxu0 0.0
    %653 = vmatpush.msra.mxu0 0.0
    %654 = vmatpush.msra.mxu0 0.0
    %655 = vmatpush.msra.mxu0 0.0
    %656 = vmatpush.msra.mxu0 0.0
    %657 = vmatpush.msra.mxu0 0.0
    %658 = vmatpush.msra.mxu0 0.0
    %659 = vmatpush.msra.mxu0 0.0
    %660 = vmatpush.msra.mxu0 0.0
    %661 = vmatpush.msra.mxu0 0.0
    %662 = vmatpush.msra.mxu0 %v69
    %663 = vmatpush.msra.mxu0 %v68
    %664 = vmatpush.msra.mxu0 %v67
    %665 = vmatpush.msra.mxu0 %v66
    %666 = vmatmul.f32.gmra.mxu0 %v549
    %v667 = vpop.f32.mrf.mxu0
    %v668 = vadd.f32 %v547, %v667
    %669 = vdwg.mxu0
    %v670 = vxor.u32 %v668, 2147483648
    %v671 = vmul.f32 %v670, 1.442695
    %v672 = vpow.pop %v671
    %v673 = vadd.f32 %v672, 1.0
    %v674 = vrcp.pop %v673
    %v675 = vmul.f32 %v673, %v674
    %v676 = vsub.f32 1.0, %v675
    %v677 = vmul.f32 %v674, %v676
    %v678 = vadd.f32 %v674, %v677
    %vm679 = vweird.f32 %v673
    %vm680 = vweird.f32 %v674
    %vm681 = vmor %vm679, %vm680
    %v682 = vsel %vm681, %v674, %v678
    %v683 = vand.u32 2147483647, %v673
    %vm684 = vcmp.eq.f32.partialorder %v683, 8.507059e+37
    %v685 = vand.u32 %v673, 2147483648
    %v686 = vor.u32 1.1754944e-38, %v685
    %v687 = vsel %vm684, %v686, %v682
    %v688 = vmul.f32 1.0, %v687
    %v689 = vmul.f32 %v628, %v542
    %v690 = vmul.f32 %v589, %v649
    %v691 = vadd.f32 %v689, %v690
    %v692 = vtanh.pop %v691
    %v693 = vmul.f32 %v688, %v692
    %694 = vst.msk [vmem:[#allocation3] sm:$0x3] %vm223, %v691
    %695 = vst.msk [vmem:[#allocation2] sm:$0x3] %vm223, %v693
    %s696 = scalar_lea.vmem [#allocation9], 6
    %697 = vst.msk [vmem:[%s696] sm:$0x3] %vm223, %v693
    %v698 = vld [vmem:[#allocation2] sm:$0x3]
    %v699 = vld [vmem:[#allocation3] sm:$0x3]
    %s700 = scalar_lea.vmem [#allocation4], 32
    %v701 = vld [vmem:[%s700] sm:$0x3]
    %v702 = vld [vmem:[%s700 + $0x2] sm:$0x3]
    %v703 = vld [vmem:[%s700 + $0x4] sm:$0x3]
    %v704 = vld [vmem:[%s700 + $0x6] sm:$0x3]
    %v706 = vsel %vm76, %v698, 0
    %708 = vmatpush.msra.mxu0 0.0
    %709 = vmatpush.msra.mxu0 0.0
    %710 = vmatpush.msra.mxu0 0.0
    %711 = vmatpush.msra.mxu0 0.0
    %712 = vmatpush.msra.mxu0 0.0
    %713 = vmatpush.msra.mxu0 0.0
    %714 = vmatpush.msra.mxu0 0.0
    %715 = vmatpush.msra.mxu0 0.0
    %716 = vmatpush.msra.mxu0 0.0
    %717 = vmatpush.msra.mxu0 0.0
    %718 = vmatpush.msra.mxu0 0.0
    %719 = vmatpush.msra.mxu0 0.0
    %720 = vmatpush.msra.mxu0 %v54
    %721 = vmatpush.msra.mxu0 %v53
    %722 = vmatpush.msra.mxu0 %v52
    %723 = vmatpush.msra.mxu0 %v51
    %724 = vmatmul.f32.gmra.mxu0 %v706
    %v725 = vpop.f32.mrf.mxu0
    %v726 = vadd.f32 %v701, %v725
    %727 = vdwg.mxu0
    %v728 = vxor.u32 %v726, 2147483648
    %v729 = vmul.f32 %v728, 1.442695
    %v730 = vpow.pop %v729
    %v731 = vadd.f32 %v730, 1.0
    %v732 = vrcp.pop %v731
    %v733 = vmul.f32 %v731, %v732
    %v734 = vsub.f32 1.0, %v733
    %v735 = vmul.f32 %v732, %v734
    %v736 = vadd.f32 %v732, %v735
    %vm737 = vweird.f32 %v731
    %vm738 = vweird.f32 %v732
    %vm739 = vmor %vm737, %vm738
    %v740 = vsel %vm739, %v732, %v736
    %v741 = vand.u32 2147483647, %v731
    %vm742 = vcmp.eq.f32.partialorder %v741, 8.507059e+37
    %v743 = vand.u32 %v731, 2147483648
    %v744 = vor.u32 1.1754944e-38, %v743
    %v745 = vsel %vm742, %v744, %v740
    %v746 = vmul.f32 1.0, %v745
    %747 = vmatpush.msra.mxu0 0.0
    %748 = vmatpush.msra.mxu0 0.0
    %749 = vmatpush.msra.mxu0 0.0
    %750 = vmatpush.msra.mxu0 0.0
    %751 = vmatpush.msra.mxu0 0.0
    %752 = vmatpush.msra.mxu0 0.0
    %753 = vmatpush.msra.mxu0 0.0
    %754 = vmatpush.msra.mxu0 0.0
    %755 = vmatpush.msra.mxu0 0.0
    %756 = vmatpush.msra.mxu0 0.0
    %757 = vmatpush.msra.mxu0 0.0
    %758 = vmatpush.msra.mxu0 0.0
    %759 = vmatpush.msra.mxu0 %v59
    %760 = vmatpush.msra.mxu0 %v58
    %761 = vmatpush.msra.mxu0 %v57
    %762 = vmatpush.msra.mxu0 %v56
    %763 = vmatmul.f32.gmra.mxu0 %v706
    %v764 = vpop.f32.mrf.mxu0
    %v765 = vadd.f32 %v702, %v764
    %766 = vdwg.mxu0
    %v767 = vxor.u32 %v765, 2147483648
    %v768 = vmul.f32 %v767, 1.442695
    %v769 = vpow.pop %v768
    %v770 = vadd.f32 %v769, 1.0
    %v771 = vrcp.pop %v770
    %v772 = vmul.f32 %v770, %v771
    %v773 = vsub.f32 1.0, %v772
    %v774 = vmul.f32 %v771, %v773
    %v775 = vadd.f32 %v771, %v774
    %vm776 = vweird.f32 %v770
    %vm777 = vweird.f32 %v771
    %vm778 = vmor %vm776, %vm777
    %v779 = vsel %vm778, %v771, %v775
    %v780 = vand.u32 2147483647, %v770
    %vm781 = vcmp.eq.f32.partialorder %v780, 8.507059e+37
    %v782 = vand.u32 %v770, 2147483648
    %v783 = vor.u32 1.1754944e-38, %v782
    %v784 = vsel %vm781, %v783, %v779
    %v785 = vmul.f32 1.0, %v784
    %786 = vmatpush.msra.mxu0 0.0
    %787 = vmatpush.msra.mxu0 0.0
    %788 = vmatpush.msra.mxu0 0.0
    %789 = vmatpush.msra.mxu0 0.0
    %790 = vmatpush.msra.mxu0 0.0
    %791 = vmatpush.msra.mxu0 0.0
    %792 = vmatpush.msra.mxu0 0.0
    %793 = vmatpush.msra.mxu0 0.0
    %794 = vmatpush.msra.mxu0 0.0
    %795 = vmatpush.msra.mxu0 0.0
    %796 = vmatpush.msra.mxu0 0.0
    %797 = vmatpush.msra.mxu0 0.0
    %798 = vmatpush.msra.mxu0 %v64
    %799 = vmatpush.msra.mxu0 %v63
    %800 = vmatpush.msra.mxu0 %v62
    %801 = vmatpush.msra.mxu0 %v61
    %802 = vmatmul.f32.gmra.mxu0 %v706
    %v803 = vpop.f32.mrf.mxu0
    %v804 = vadd.f32 %v703, %v803
    %805 = vdwg.mxu0
    %v806 = vtanh.pop %v804
    %807 = vmatpush.msra.mxu0 0.0
    %808 = vmatpush.msra.mxu0 0.0
    %809 = vmatpush.msra.mxu0 0.0
    %810 = vmatpush.msra.mxu0 0.0
    %811 = vmatpush.msra.mxu0 0.0
    %812 = vmatpush.msra.mxu0 0.0
    %813 = vmatpush.msra.mxu0 0.0
    %814 = vmatpush.msra.mxu0 0.0
    %815 = vmatpush.msra.mxu0 0.0
    %816 = vmatpush.msra.mxu0 0.0
    %817 = vmatpush.msra.mxu0 0.0
    %818 = vmatpush.msra.mxu0 0.0
    %819 = vmatpush.msra.mxu0 %v69
    %820 = vmatpush.msra.mxu0 %v68
    %821 = vmatpush.msra.mxu0 %v67
    %822 = vmatpush.msra.mxu0 %v66
    %823 = vmatmul.f32.gmra.mxu0 %v706
    %v824 = vpop.f32.mrf.mxu0
    %v825 = vadd.f32 %v704, %v824
    %826 = vdwg.mxu0
    %v827 = vxor.u32 %v825, 2147483648
    %v828 = vmul.f32 %v827, 1.442695
    %v829 = vpow.pop %v828
    %v830 = vadd.f32 %v829, 1.0
    %v831 = vrcp.pop %v830
    %v832 = vmul.f32 %v830, %v831
    %v833 = vsub.f32 1.0, %v832
    %v834 = vmul.f32 %v831, %v833
    %v835 = vadd.f32 %v831, %v834
    %vm836 = vweird.f32 %v830
    %vm837 = vweird.f32 %v831
    %vm838 = vmor %vm836, %vm837
    %v839 = vsel %vm838, %v831, %v835
    %v840 = vand.u32 2147483647, %v830
    %vm841 = vcmp.eq.f32.partialorder %v840, 8.507059e+37
    %v842 = vand.u32 %v830, 2147483648
    %v843 = vor.u32 1.1754944e-38, %v842
    %v844 = vsel %vm841, %v843, %v839
    %v845 = vmul.f32 1.0, %v844
    %v846 = vmul.f32 %v785, %v699
    %v847 = vmul.f32 %v746, %v806
    %v848 = vadd.f32 %v846, %v847
    %v849 = vtanh.pop %v848
    %v850 = vmul.f32 %v845, %v849
    %851 = vst.msk [vmem:[#allocation3] sm:$0x3] %vm223, %v848
    %852 = vst.msk [vmem:[#allocation2] sm:$0x3] %vm223, %v850
    %s853 = scalar_lea.vmem [#allocation9], 8
    %854 = vst.msk [vmem:[%s853] sm:$0x3] %vm223, %v850
    %v855 = vld [vmem:[#allocation2] sm:$0x3]
    %v856 = vld [vmem:[#allocation3] sm:$0x3]
    %s857 = scalar_lea.vmem [#allocation4], 40
    %v858 = vld [vmem:[%s857] sm:$0x3]
    %v859 = vld [vmem:[%s857 + $0x2] sm:$0x3]
    %v860 = vld [vmem:[%s857 + $0x4] sm:$0x3]
    %v861 = vld [vmem:[%s857 + $0x6] sm:$0x3]
    %v863 = vsel %vm76, %v855, 0
    %865 = vmatpush.msra.mxu0 0.0
    %866 = vmatpush.msra.mxu0 0.0
    %867 = vmatpush.msra.mxu0 0.0
    %868 = vmatpush.msra.mxu0 0.0
    %869 = vmatpush.msra.mxu0 0.0
    %870 = vmatpush.msra.mxu0 0.0
    %871 = vmatpush.msra.mxu0 0.0
    %872 = vmatpush.msra.mxu0 0.0
    %873 = vmatpush.msra.mxu0 0.0
    %874 = vmatpush.msra.mxu0 0.0
    %875 = vmatpush.msra.mxu0 0.0
    %876 = vmatpush.msra.mxu0 0.0
    %877 = vmatpush.msra.mxu0 %v54
    %878 = vmatpush.msra.mxu0 %v53
    %879 = vmatpush.msra.mxu0 %v52
    %880 = vmatpush.msra.mxu0 %v51
    %881 = vmatmul.f32.gmra.mxu0 %v863
    %v882 = vpop.f32.mrf.mxu0
    %v883 = vadd.f32 %v858, %v882
    %884 = vdwg.mxu0
    %v885 = vxor.u32 %v883, 2147483648
    %v886 = vmul.f32 %v885, 1.442695
    %v887 = vpow.pop %v886
    %v888 = vadd.f32 %v887, 1.0
    %v889 = vrcp.pop %v888
    %v890 = vmul.f32 %v888, %v889
    %v891 = vsub.f32 1.0, %v890
    %v892 = vmul.f32 %v889, %v891
    %v893 = vadd.f32 %v889, %v892
    %vm894 = vweird.f32 %v888
    %vm895 = vweird.f32 %v889
    %vm896 = vmor %vm894, %vm895
    %v897 = vsel %vm896, %v889, %v893
    %v898 = vand.u32 2147483647, %v888
    %vm899 = vcmp.eq.f32.partialorder %v898, 8.507059e+37
    %v900 = vand.u32 %v888, 2147483648
    %v901 = vor.u32 1.1754944e-38, %v900
    %v902 = vsel %vm899, %v901, %v897
    %v903 = vmul.f32 1.0, %v902
    %904 = vmatpush.msra.mxu0 0.0
    %905 = vmatpush.msra.mxu0 0.0
    %906 = vmatpush.msra.mxu0 0.0
    %907 = vmatpush.msra.mxu0 0.0
    %908 = vmatpush.msra.mxu0 0.0
    %909 = vmatpush.msra.mxu0 0.0
    %910 = vmatpush.msra.mxu0 0.0
    %911 = vmatpush.msra.mxu0 0.0
    %912 = vmatpush.msra.mxu0 0.0
    %913 = vmatpush.msra.mxu0 0.0
    %914 = vmatpush.msra.mxu0 0.0
    %915 = vmatpush.msra.mxu0 0.0
    %916 = vmatpush.msra.mxu0 %v59
    %917 = vmatpush.msra.mxu0 %v58
    %918 = vmatpush.msra.mxu0 %v57
    %919 = vmatpush.msra.mxu0 %v56
    %920 = vmatmul.f32.gmra.mxu0 %v863
    %v921 = vpop.f32.mrf.mxu0
    %v922 = vadd.f32 %v859, %v921
    %923 = vdwg.mxu0
    %v924 = vxor.u32 %v922, 2147483648
    %v925 = vmul.f32 %v924, 1.442695
    %v926 = vpow.pop %v925
    %v927 = vadd.f32 %v926, 1.0
    %v928 = vrcp.pop %v927
    %v929 = vmul.f32 %v927, %v928
    %v930 = vsub.f32 1.0, %v929
    %v931 = vmul.f32 %v928, %v930
    %v932 = vadd.f32 %v928, %v931
    %vm933 = vweird.f32 %v927
    %vm934 = vweird.f32 %v928
    %vm935 = vmor %vm933, %vm934
    %v936 = vsel %vm935, %v928, %v932
    %v937 = vand.u32 2147483647, %v927
    %vm938 = vcmp.eq.f32.partialorder %v937, 8.507059e+37
    %v939 = vand.u32 %v927, 2147483648
    %v940 = vor.u32 1.1754944e-38, %v939
    %v941 = vsel %vm938, %v940, %v936
    %v942 = vmul.f32 1.0, %v941
    %943 = vmatpush.msra.mxu0 0.0
    %944 = vmatpush.msra.mxu0 0.0
    %945 = vmatpush.msra.mxu0 0.0
    %946 = vmatpush.msra.mxu0 0.0
    %947 = vmatpush.msra.mxu0 0.0
    %948 = vmatpush.msra.mxu0 0.0
    %949 = vmatpush.msra.mxu0 0.0
    %950 = vmatpush.msra.mxu0 0.0
    %951 = vmatpush.msra.mxu0 0.0
    %952 = vmatpush.msra.mxu0 0.0
    %953 = vmatpush.msra.mxu0 0.0
    %954 = vmatpush.msra.mxu0 0.0
    %955 = vmatpush.msra.mxu0 %v64
    %956 = vmatpush.msra.mxu0 %v63
    %957 = vmatpush.msra.mxu0 %v62
    %958 = vmatpush.msra.mxu0 %v61
    %959 = vmatmul.f32.gmra.mxu0 %v863
    %v960 = vpop.f32.mrf.mxu0
    %v961 = vadd.f32 %v860, %v960
    %962 = vdwg.mxu0
    %v963 = vtanh.pop %v961
    %964 = vmatpush.msra.mxu0 0.0
    %965 = vmatpush.msra.mxu0 0.0
    %966 = vmatpush.msra.mxu0 0.0
    %967 = vmatpush.msra.mxu0 0.0
    %968 = vmatpush.msra.mxu0 0.0
    %969 = vmatpush.msra.mxu0 0.0
    %970 = vmatpush.msra.mxu0 0.0
    %971 = vmatpush.msra.mxu0 0.0
    %972 = vmatpush.msra.mxu0 0.0
    %973 = vmatpush.msra.mxu0 0.0
    %974 = vmatpush.msra.mxu0 0.0
    %975 = vmatpush.msra.mxu0 0.0
    %976 = vmatpush.msra.mxu0 %v69
    %977 = vmatpush.msra.mxu0 %v68
    %978 = vmatpush.msra.mxu0 %v67
    %979 = vmatpush.msra.mxu0 %v66
    %980 = vmatmul.f32.gmra.mxu0 %v863
    %v981 = vpop.f32.mrf.mxu0
    %v982 = vadd.f32 %v861, %v981
    %983 = vdwg.mxu0
    %v984 = vxor.u32 %v982, 2147483648
    %v985 = vmul.f32 %v984, 1.442695
    %v986 = vpow.pop %v985
    %v987 = vadd.f32 %v986, 1.0
    %v988 = vrcp.pop %v987
    %v989 = vmul.f32 %v987, %v988
    %v990 = vsub.f32 1.0, %v989
    %v991 = vmul.f32 %v988, %v990
    %v992 = vadd.f32 %v988, %v991
    %vm993 = vweird.f32 %v987
    %vm994 = vweird.f32 %v988
    %vm995 = vmor %vm993, %vm994
    %v996 = vsel %vm995, %v988, %v992
    %v997 = vand.u32 2147483647, %v987
    %vm998 = vcmp.eq.f32.partialorder %v997, 8.507059e+37
    %v999 = vand.u32 %v987, 2147483648
    %v1000 = vor.u32 1.1754944e-38, %v999
    %v1001 = vsel %vm998, %v1000, %v996
    %v1002 = vmul.f32 1.0, %v1001
    %v1003 = vmul.f32 %v942, %v856
    %v1004 = vmul.f32 %v903, %v963
    %v1005 = vadd.f32 %v1003, %v1004
    %v1006 = vtanh.pop %v1005
    %v1007 = vmul.f32 %v1002, %v1006
    %1008 = vst.msk [vmem:[#allocation3] sm:$0x3] %vm223, %v1005
    %1009 = vst.msk [vmem:[#allocation2] sm:$0x3] %vm223, %v1007
    %s1010 = scalar_lea.vmem [#allocation9], 10
    %1011 = vst.msk [vmem:[%s1010] sm:$0x3] %vm223, %v1007
    %v1012 = vld [vmem:[#allocation2] sm:$0x3]
    %v1013 = vld [vmem:[#allocation3] sm:$0x3]
    %s1014 = scalar_lea.vmem [#allocation4], 48
    %v1015 = vld [vmem:[%s1014] sm:$0x3]
    %v1016 = vld [vmem:[%s1014 + $0x2] sm:$0x3]
    %v1017 = vld [vmem:[%s1014 + $0x4] sm:$0x3]
    %v1018 = vld [vmem:[%s1014 + $0x6] sm:$0x3]
    %v1020 = vsel %vm76, %v1012, 0
    %1022 = vmatpush.msra.mxu0 0.0
    %1023 = vmatpush.msra.mxu0 0.0
    %1024 = vmatpush.msra.mxu0 0.0
    %1025 = vmatpush.msra.mxu0 0.0
    %1026 = vmatpush.msra.mxu0 0.0
    %1027 = vmatpush.msra.mxu0 0.0
    %1028 = vmatpush.msra.mxu0 0.0
    %1029 = vmatpush.msra.mxu0 0.0
    %1030 = vmatpush.msra.mxu0 0.0
    %1031 = vmatpush.msra.mxu0 0.0
    %1032 = vmatpush.msra.mxu0 0.0
    %1033 = vmatpush.msra.mxu0 0.0
    %1034 = vmatpush.msra.mxu0 %v54
    %1035 = vmatpush.msra.mxu0 %v53
    %1036 = vmatpush.msra.mxu0 %v52
    %1037 = vmatpush.msra.mxu0 %v51
    %1038 = vmatmul.f32.gmra.mxu0 %v1020
    %v1039 = vpop.f32.mrf.mxu0
    %v1040 = vadd.f32 %v1015, %v1039
    %1041 = vdwg.mxu0
    %v1042 = vxor.u32 %v1040, 2147483648
    %v1043 = vmul.f32 %v1042, 1.442695
    %v1044 = vpow.pop %v1043
    %v1045 = vadd.f32 %v1044, 1.0
    %v1046 = vrcp.pop %v1045
    %v1047 = vmul.f32 %v1045, %v1046
    %v1048 = vsub.f32 1.0, %v1047
    %v1049 = vmul.f32 %v1046, %v1048
    %v1050 = vadd.f32 %v1046, %v1049
    %vm1051 = vweird.f32 %v1045
    %vm1052 = vweird.f32 %v1046
    %vm1053 = vmor %vm1051, %vm1052
    %v1054 = vsel %vm1053, %v1046, %v1050
    %v1055 = vand.u32 2147483647, %v1045
    %vm1056 = vcmp.eq.f32.partialorder %v1055, 8.507059e+37
    %v1057 = vand.u32 %v1045, 2147483648
    %v1058 = vor.u32 1.1754944e-38, %v1057
    %v1059 = vsel %vm1056, %v1058, %v1054
    %v1060 = vmul.f32 1.0, %v1059
    %1061 = vmatpush.msra.mxu0 0.0
    %1062 = vmatpush.msra.mxu0 0.0
    %1063 = vmatpush.msra.mxu0 0.0
    %1064 = vmatpush.msra.mxu0 0.0
    %1065 = vmatpush.msra.mxu0 0.0
    %1066 = vmatpush.msra.mxu0 0.0
    %1067 = vmatpush.msra.mxu0 0.0
    %1068 = vmatpush.msra.mxu0 0.0
    %1069 = vmatpush.msra.mxu0 0.0
    %1070 = vmatpush.msra.mxu0 0.0
    %1071 = vmatpush.msra.mxu0 0.0
    %1072 = vmatpush.msra.mxu0 0.0
    %1073 = vmatpush.msra.mxu0 %v59
    %1074 = vmatpush.msra.mxu0 %v58
    %1075 = vmatpush.msra.mxu0 %v57
    %1076 = vmatpush.msra.mxu0 %v56
    %1077 = vmatmul.f32.gmra.mxu0 %v1020
    %v1078 = vpop.f32.mrf.mxu0
    %v1079 = vadd.f32 %v1016, %v1078
    %1080 = vdwg.mxu0
    %v1081 = vxor.u32 %v1079, 2147483648
    %v1082 = vmul.f32 %v1081, 1.442695
    %v1083 = vpow.pop %v1082
    %v1084 = vadd.f32 %v1083, 1.0
    %v1085 = vrcp.pop %v1084
    %v1086 = vmul.f32 %v1084, %v1085
    %v1087 = vsub.f32 1.0, %v1086
    %v1088 = vmul.f32 %v1085, %v1087
    %v1089 = vadd.f32 %v1085, %v1088
    %vm1090 = vweird.f32 %v1084
    %vm1091 = vweird.f32 %v1085
    %vm1092 = vmor %vm1090, %vm1091
    %v1093 = vsel %vm1092, %v1085, %v1089
    %v1094 = vand.u32 2147483647, %v1084
    %vm1095 = vcmp.eq.f32.partialorder %v1094, 8.507059e+37
    %v1096 = vand.u32 %v1084, 2147483648
    %v1097 = vor.u32 1.1754944e-38, %v1096
    %v1098 = vsel %vm1095, %v1097, %v1093
    %v1099 = vmul.f32 1.0, %v1098
    %1100 = vmatpush.msra.mxu0 0.0
    %1101 = vmatpush.msra.mxu0 0.0
    %1102 = vmatpush.msra.mxu0 0.0
    %1103 = vmatpush.msra.mxu0 0.0
    %1104 = vmatpush.msra.mxu0 0.0
    %1105 = vmatpush.msra.mxu0 0.0
    %1106 = vmatpush.msra.mxu0 0.0
    %1107 = vmatpush.msra.mxu0 0.0
    %1108 = vmatpush.msra.mxu0 0.0
    %1109 = vmatpush.msra.mxu0 0.0
    %1110 = vmatpush.msra.mxu0 0.0
    %1111 = vmatpush.msra.mxu0 0.0
    %1112 = vmatpush.msra.mxu0 %v64
    %1113 = vmatpush.msra.mxu0 %v63
    %1114 = vmatpush.msra.mxu0 %v62
    %1115 = vmatpush.msra.mxu0 %v61
    %1116 = vmatmul.f32.gmra.mxu0 %v1020
    %v1117 = vpop.f32.mrf.mxu0
    %v1118 = vadd.f32 %v1017, %v1117
    %1119 = vdwg.mxu0
    %v1120 = vtanh.pop %v1118
    %1121 = vmatpush.msra.mxu0 0.0
    %1122 = vmatpush.msra.mxu0 0.0
    %1123 = vmatpush.msra.mxu0 0.0
    %1124 = vmatpush.msra.mxu0 0.0
    %1125 = vmatpush.msra.mxu0 0.0
    %1126 = vmatpush.msra.mxu0 0.0
    %1127 = vmatpush.msra.mxu0 0.0
    %1128 = vmatpush.msra.mxu0 0.0
    %1129 = vmatpush.msra.mxu0 0.0
    %1130 = vmatpush.msra.mxu0 0.0
    %1131 = vmatpush.msra.mxu0 0.0
    %1132 = vmatpush.msra.mxu0 0.0
    %1133 = vmatpush.msra.mxu0 %v69
    %1134 = vmatpush.msra.mxu0 %v68
    %1135 = vmatpush.msra.mxu0 %v67
    %1136 = vmatpush.msra.mxu0 %v66
    %1137 = vmatmul.f32.gmra.mxu0 %v1020
    %v1138 = vpop.f32.mrf.mxu0
    %v1139 = vadd.f32 %v1018, %v1138
    %1140 = vdwg.mxu0
    %v1141 = vxor.u32 %v1139, 2147483648
    %v1142 = vmul.f32 %v1141, 1.442695
    %v1143 = vpow.pop %v1142
    %v1144 = vadd.f32 %v1143, 1.0
    %v1145 = vrcp.pop %v1144
    %v1146 = vmul.f32 %v1144, %v1145
    %v1147 = vsub.f32 1.0, %v1146
    %v1148 = vmul.f32 %v1145, %v1147
    %v1149 = vadd.f32 %v1145, %v1148
    %vm1150 = vweird.f32 %v1144
    %vm1151 = vweird.f32 %v1145
    %vm1152 = vmor %vm1150, %vm1151
    %v1153 = vsel %vm1152, %v1145, %v1149
    %v1154 = vand.u32 2147483647, %v1144
    %vm1155 = vcmp.eq.f32.partialorder %v1154, 8.507059e+37
    %v1156 = vand.u32 %v1144, 2147483648
    %v1157 = vor.u32 1.1754944e-38, %v1156
    %v1158 = vsel %vm1155, %v1157, %v1153
    %v1159 = vmul.f32 1.0, %v1158
    %v1160 = vmul.f32 %v1099, %v1013
    %v1161 = vmul.f32 %v1060, %v1120
    %v1162 = vadd.f32 %v1160, %v1161
    %v1163 = vtanh.pop %v1162
    %v1164 = vmul.f32 %v1159, %v1163
    %1165 = vst.msk [vmem:[#allocation3] sm:$0x3] %vm223, %v1162
    %1166 = vst.msk [vmem:[#allocation2] sm:$0x3] %vm223, %v1164
    %s1167 = scalar_lea.vmem [#allocation9], 12
    %1168 = vst.msk [vmem:[%s1167] sm:$0x3] %vm223, %v1164
    %v1169 = vld [vmem:[#allocation2] sm:$0x3]
    %v1170 = vld [vmem:[#allocation3] sm:$0x3]
    %s1171 = scalar_lea.vmem [#allocation4], 56
    %v1172 = vld [vmem:[%s1171] sm:$0x3]
    %v1173 = vld [vmem:[%s1171 + $0x2] sm:$0x3]
    %v1174 = vld [vmem:[%s1171 + $0x4] sm:$0x3]
    %v1175 = vld [vmem:[%s1171 + $0x6] sm:$0x3]
    %v1177 = vsel %vm76, %v1169, 0
    %1179 = vmatpush.msra.mxu0 0.0
    %1180 = vmatpush.msra.mxu0 0.0
    %1181 = vmatpush.msra.mxu0 0.0
    %1182 = vmatpush.msra.mxu0 0.0
    %1183 = vmatpush.msra.mxu0 0.0
    %1184 = vmatpush.msra.mxu0 0.0
    %1185 = vmatpush.msra.mxu0 0.0
    %1186 = vmatpush.msra.mxu0 0.0
    %1187 = vmatpush.msra.mxu0 0.0
    %1188 = vmatpush.msra.mxu0 0.0
    %1189 = vmatpush.msra.mxu0 0.0
    %1190 = vmatpush.msra.mxu0 0.0
    %1191 = vmatpush.msra.mxu0 %v54
    %1192 = vmatpush.msra.mxu0 %v53
    %1193 = vmatpush.msra.mxu0 %v52
    %1194 = vmatpush.msra.mxu0 %v51
    %1195 = vmatmul.f32.gmra.mxu0 %v1177
    %v1196 = vpop.f32.mrf.mxu0
    %v1197 = vadd.f32 %v1172, %v1196
    %1198 = vdwg.mxu0
    %v1199 = vxor.u32 %v1197, 2147483648
    %v1200 = vmul.f32 %v1199, 1.442695
    %v1201 = vpow.pop %v1200
    %v1202 = vadd.f32 %v1201, 1.0
    %v1203 = vrcp.pop %v1202
    %v1204 = vmul.f32 %v1202, %v1203
    %v1205 = vsub.f32 1.0, %v1204
    %v1206 = vmul.f32 %v1203, %v1205
    %v1207 = vadd.f32 %v1203, %v1206
    %vm1208 = vweird.f32 %v1202
    %vm1209 = vweird.f32 %v1203
    %vm1210 = vmor %vm1208, %vm1209
    %v1211 = vsel %vm1210, %v1203, %v1207
    %v1212 = vand.u32 2147483647, %v1202
    %vm1213 = vcmp.eq.f32.partialorder %v1212, 8.507059e+37
    %v1214 = vand.u32 %v1202, 2147483648
    %v1215 = vor.u32 1.1754944e-38, %v1214
    %v1216 = vsel %vm1213, %v1215, %v1211
    %v1217 = vmul.f32 1.0, %v1216
    %1218 = vmatpush.msra.mxu0 0.0
    %1219 = vmatpush.msra.mxu0 0.0
    %1220 = vmatpush.msra.mxu0 0.0
    %1221 = vmatpush.msra.mxu0 0.0
    %1222 = vmatpush.msra.mxu0 0.0
    %1223 = vmatpush.msra.mxu0 0.0
    %1224 = vmatpush.msra.mxu0 0.0
    %1225 = vmatpush.msra.mxu0 0.0
    %1226 = vmatpush.msra.mxu0 0.0
    %1227 = vmatpush.msra.mxu0 0.0
    %1228 = vmatpush.msra.mxu0 0.0
    %1229 = vmatpush.msra.mxu0 0.0
    %1230 = vmatpush.msra.mxu0 %v59
    %1231 = vmatpush.msra.mxu0 %v58
    %1232 = vmatpush.msra.mxu0 %v57
    %1233 = vmatpush.msra.mxu0 %v56
    %1234 = vmatmul.f32.gmra.mxu0 %v1177
    %v1235 = vpop.f32.mrf.mxu0
    %v1236 = vadd.f32 %v1173, %v1235
    %1237 = vdwg.mxu0
    %v1238 = vxor.u32 %v1236, 2147483648
    %v1239 = vmul.f32 %v1238, 1.442695
    %v1240 = vpow.pop %v1239
    %v1241 = vadd.f32 %v1240, 1.0
    %v1242 = vrcp.pop %v1241
    %v1243 = vmul.f32 %v1241, %v1242
    %v1244 = vsub.f32 1.0, %v1243
    %v1245 = vmul.f32 %v1242, %v1244
    %v1246 = vadd.f32 %v1242, %v1245
    %vm1247 = vweird.f32 %v1241
    %vm1248 = vweird.f32 %v1242
    %vm1249 = vmor %vm1247, %vm1248
    %v1250 = vsel %vm1249, %v1242, %v1246
    %v1251 = vand.u32 2147483647, %v1241
    %vm1252 = vcmp.eq.f32.partialorder %v1251, 8.507059e+37
    %v1253 = vand.u32 %v1241, 2147483648
    %v1254 = vor.u32 1.1754944e-38, %v1253
    %v1255 = vsel %vm1252, %v1254, %v1250
    %v1256 = vmul.f32 1.0, %v1255
    %1257 = vmatpush.msra.mxu0 0.0
    %1258 = vmatpush.msra.mxu0 0.0
    %1259 = vmatpush.msra.mxu0 0.0
    %1260 = vmatpush.msra.mxu0 0.0
    %1261 = vmatpush.msra.mxu0 0.0
    %1262 = vmatpush.msra.mxu0 0.0
    %1263 = vmatpush.msra.mxu0 0.0
    %1264 = vmatpush.msra.mxu0 0.0
    %1265 = vmatpush.msra.mxu0 0.0
    %1266 = vmatpush.msra.mxu0 0.0
    %1267 = vmatpush.msra.mxu0 0.0
    %1268 = vmatpush.msra.mxu0 0.0
    %1269 = vmatpush.msra.mxu0 %v64
    %1270 = vmatpush.msra.mxu0 %v63
    %1271 = vmatpush.msra.mxu0 %v62
    %1272 = vmatpush.msra.mxu0 %v61
    %1273 = vmatmul.f32.gmra.mxu0 %v1177
    %v1274 = vpop.f32.mrf.mxu0
    %v1275 = vadd.f32 %v1174, %v1274
    %1276 = vdwg.mxu0
    %v1277 = vtanh.pop %v1275
    %1278 = vmatpush.msra.mxu0 0.0
    %1279 = vmatpush.msra.mxu0 0.0
    %1280 = vmatpush.msra.mxu0 0.0
    %1281 = vmatpush.msra.mxu0 0.0
    %1282 = vmatpush.msra.mxu0 0.0
    %1283 = vmatpush.msra.mxu0 0.0
    %1284 = vmatpush.msra.mxu0 0.0
    %1285 = vmatpush.msra.mxu0 0.0
    %1286 = vmatpush.msra.mxu0 0.0
    %1287 = vmatpush.msra.mxu0 0.0
    %1288 = vmatpush.msra.mxu0 0.0
    %1289 = vmatpush.msra.mxu0 0.0
    %1290 = vmatpush.msra.mxu0 %v69
    %1291 = vmatpush.msra.mxu0 %v68
    %1292 = vmatpush.msra.mxu0 %v67
    %1293 = vmatpush.msra.mxu0 %v66
    %1294 = vmatmul.f32.gmra.mxu0 %v1177
    %v1295 = vpop.f32.mrf.mxu0
    %v1296 = vadd.f32 %v1175, %v1295
    %1297 = vdwg.mxu0
    %v1298 = vxor.u32 %v1296, 2147483648
    %v1299 = vmul.f32 %v1298, 1.442695
    %v1300 = vpow.pop %v1299
    %v1301 = vadd.f32 %v1300, 1.0
    %v1302 = vrcp.pop %v1301
    %v1303 = vmul.f32 %v1301, %v1302
    %v1304 = vsub.f32 1.0, %v1303
    %v1305 = vmul.f32 %v1302, %v1304
    %v1306 = vadd.f32 %v1302, %v1305
    %vm1307 = vweird.f32 %v1301
    %vm1308 = vweird.f32 %v1302
    %vm1309 = vmor %vm1307, %vm1308
    %v1310 = vsel %vm1309, %v1302, %v1306
    %v1311 = vand.u32 2147483647, %v1301
    %vm1312 = vcmp.eq.f32.partialorder %v1311, 8.507059e+37
    %v1313 = vand.u32 %v1301, 2147483648
    %v1314 = vor.u32 1.1754944e-38, %v1313
    %v1315 = vsel %vm1312, %v1314, %v1310
    %v1316 = vmul.f32 1.0, %v1315
    %v1317 = vmul.f32 %v1256, %v1170
    %v1318 = vmul.f32 %v1217, %v1277
    %v1319 = vadd.f32 %v1317, %v1318
    %v1320 = vtanh.pop %v1319
    %v1321 = vmul.f32 %v1316, %v1320
    %1322 = vst.msk [vmem:[#allocation3] sm:$0x3] %vm223, %v1319
    %1323 = vst.msk [vmem:[#allocation2] sm:$0x3] %vm223, %v1321
    %s1324 = scalar_lea.vmem [#allocation9], 14
    %1325 = vst.msk [vmem:[%s1324] sm:$0x3] %vm223, %v1321
    // Predicated region
    $region22: #{tpu_custom_call.1} parent=1 // pred_check
      _
    $region23: #{tpu_custom_call.1} parent=1 // pred_check_branch
      %1327 = sbr.rel (0) target = $region25
    $region24: #{tpu_custom_call.1} parent=1 // pred_region
      %1329 = vsyncadd [#allocation6], 0
      %s1330 = sshll.u32 [#allocation9], 4
      %s1331 = int_to_ptr.vmem [resolvable:$true] %s1330
      %s1332 = sshll.u32 %s2, 4
      %s1333 = int_to_ptr.hbm [resolvable:$true] %s1332
      %1338 = dma.vmem_to_hbm [thread:$0]  %s1331, 256, %s1333, [#allocation6], 32, 32, 2
    $region25: #{tpu_custom_call.1} parent=1 // pred_fallthru
      _
    // Predicated region
    $region26: #{tpu_custom_call.1} parent=1 // pred_check
      _
    $region27: #{tpu_custom_call.1} parent=1 // pred_check_branch
      %1340 = sbr.rel (0) target = $region29
    $region28: #{tpu_custom_call.1} parent=1 // pred_region
      %1342 = dma.done [#allocation6], 256
    $region29: #{tpu_custom_call.1} parent=1 // pred_fallthru
      _
    %1343 = vsyncpa [#allocation5], 1
    %1344 = vsyncpa [#allocation8], 1
    %1345 = vsyncpa [#allocation6], 1

</llo_original>
